<compile_context>
chip_gen: v6e
topology: v6e:2x2x1
jax: 0.10.0
libtpu: 0.0.40
codegen_flags: <defaults>
</compile_context>

<pallas_src>
import functools

import jax
import jax.numpy as jnp
from jax.experimental import pallas as pl
from jax.experimental.pallas import tpu as pltpu


# ---------------------------------------------------------------------------
# hardware / tiling helpers
# ---------------------------------------------------------------------------
def _tpu_vmem_capacity_bytes():
    """Physical VMEM per TensorCore; conservative fallback if query fails."""
    try:
        return int(pltpu.get_tpu_info().vmem_capacity_bytes)
    except Exception:
        return 64 << 20   # v7x-sized (smallest current gen) -> safe everywhere


def _pick_tile(dim, target, granule):
    """Largest divisor of `dim` that is <= `target` and a multiple of `granule`.
    Falls back to the full extent (always a legal block shape)."""
    if dim <= target:
        return dim
    t = (target // granule) * granule
    while t >= granule:
        if dim % t == 0:
            return t
        t -= granule
    return dim


def _largest_divisor_leq(n, target):
    t = max(1, min(n, target))
    while n % t != 0:
        t -= 1
    return t


def _vmem_limit_bytes(cap):
    return int(min(cap // 2, 64 << 20))


# ---------------------------------------------------------------------------
# Kernel 1: fused Q/K/V projection.  x tile is read once per (i, j, k) step and
# drives three bf16 MXU matmuls into three f32 accumulators; bias (+ the
# softmax scale for Q) is applied in the k==last finalize.
# ---------------------------------------------------------------------------
def _qkv_kernel(x_ref, wq_ref, wk_ref, wv_ref, bq_ref, bk_ref, bv_ref,
                q_ref, k_ref, v_ref, accq, acck, accv, *, scale):
    @pl.when(pl.program_id(2) == 0)
    def _():
        accq[...] = jnp.zeros_like(accq)
        acck[...] = jnp.zeros_like(acck)
        accv[...] = jnp.zeros_like(accv)

    xb = x_ref[...].astype(jnp.bfloat16)          # bf16 operands -> native MXU
    accq[...] += jnp.dot(xb, wq_ref[...], preferred_element_type=jnp.float32)
    acck[...] += jnp.dot(xb, wk_ref[...], preferred_element_type=jnp.float32)
    accv[...] += jnp.dot(xb, wv_ref[...], preferred_element_type=jnp.float32)

    @pl.when(pl.program_id(2) == pl.num_programs(2) - 1)
    def _():
        # 1/sqrt(dim_head) folded into Q here instead of per attention step.
        q_ref[...] = ((accq[...] + bq_ref[...]) * scale).astype(q_ref.dtype)
        k_ref[...] = (acck[...] + bk_ref[...]).astype(k_ref.dtype)
        v_ref[...] = (accv[...] + bv_ref[...]).astype(v_ref.dtype)


def pallas_qkv_proj(x2d, wq, wk, wv, bq, bk, bv, scale,
                    *, out_dtype=jnp.bfloat16):
    """x2d: [M, D]; w*: [D, D]; b*: [D] -> (Q, K, V) each [M, D] in out_dtype."""
    M, D = x2d.shape
    cap = _tpu_vmem_capacity_bytes()
    tm_target = 512 if cap >= (100 << 20) else 256     # v5e/v6e vs v7x
    tm = _pick_tile(M, tm_target, 16)
    tn = _pick_tile(D, 512, 128)
    tk = _pick_tile(D, 512, 128)
    grid = (M // tm, D // tn, D // tk)

    # Weights fed to the MXU in bf16 (one cheap cast per call, halves DMA).
    wq, wk, wv = (w.astype(jnp.bfloat16) for w in (wq, wk, wv))
    bq2, bk2, bv2 = (b.reshape(1, D).astype(jnp.float32) for b in (bq, bk, bv))

    ce = pl.CostEstimate(
        flops=3 * 2 * M * D * D,
        transcendentals=0,
        bytes_accessed=4 * M * D + 3 * 2 * D * D + 3 * 2 * M * D + 3 * 4 * D)

    w_spec = pl.BlockSpec((tk, tn), lambda i, j, k: (k, j))
    b_spec = pl.BlockSpec((1, tn), lambda i, j, k: (0, j))
    o_spec = pl.BlockSpec((tm, tn), lambda i, j, k: (i, j))
    out_sds = jax.ShapeDtypeStruct((M, D), out_dtype)

    kernel = functools.partial(_qkv_kernel, scale=scale)
    return pl.pallas_call(
        kernel,
        out_shape=(out_sds, out_sds, out_sds),
        grid_spec=pltpu.PrefetchScalarGridSpec(
            num_scalar_prefetch=0,
            grid=grid,
            in_specs=[
                pl.BlockSpec((tm, tk), lambda i, j, k: (i, k)),
                w_spec, w_spec, w_spec,
                b_spec, b_spec, b_spec,
            ],
            out_specs=[o_spec, o_spec, o_spec],
            scratch_shapes=[pltpu.VMEM((tm, tn), jnp.float32)] * 3,
        ),
        compiler_params=pltpu.CompilerParams(
            dimension_semantics=("parallel", "parallel", "arbitrary"),
            vmem_limit_bytes=_vmem_limit_bytes(cap)),
        cost_estimate=ce,
    )(x2d, wq, wk, wv, bq2, bk2, bv2)


# ---------------------------------------------------------------------------
# Kernel 2: scaled dot-product attention, a block of (batch*head) slices per
# grid step.  Scale already folded into Q; bf16 MXU operands, f32 softmax.
# ---------------------------------------------------------------------------
def _attn_kernel(q_ref, k_ref, v_ref, o_ref):
    q = q_ref[...].astype(jnp.bfloat16)                  # [hb, S, dh]
    k = k_ref[...].astype(jnp.bfloat16)

    # Batched QK^T contracting the last dims -> no explicit k transpose.
    s = jnp.einsum("bqd,bkd->bqk", q, k,
                   preferred_element_type=jnp.float32)   # [hb, S, S] f32
    s = s - jnp.max(s, axis=-1, keepdims=True)
    p = jnp.exp(s)
    inv = pl.reciprocal(jnp.sum(p, axis=-1, keepdims=True), approx=True)
    p = (p * inv).astype(jnp.bfloat16)                   # bf16 P for the MXU

    ctx = jnp.einsum("bqk,bkd->bqd", p, v_ref[...].astype(jnp.bfloat16),
                     preferred_element_type=jnp.float32)
    o_ref[...] = ctx.astype(o_ref.dtype)


def pallas_attention(q, k, v, *, out_dtype=jnp.bfloat16):
    """q, k, v: [BH, S, dh] (scale pre-folded into q) -> context [BH, S, dh]."""
    BH, S, dh = q.shape
    cap = _tpu_vmem_capacity_bytes()
    # Generation-aware working-set budget: ~16 MiB on v5e/v6e (128 MiB VMEM),
    # ~8 MiB on v7x (64 MiB VMEM).
    budget = max(1 << 20, min(16 << 20, cap // 8))
    qkv_bytes = q.dtype.itemsize
    per_slice = 3 * S * dh * qkv_bytes + 2 * S * S * 4   # q/k/v tiles + s, p f32
    hb_budget = max(1, budget // per_slice)
    # Keep >= 2 grid steps so the "parallel" axis can shard over v7x's two TCs.
    hb_cap = max(1, BH // 2)
    hb = _largest_divisor_leq(BH, min(hb_budget, hb_cap))
    grid = (BH // hb,)

    spec = pl.BlockSpec((hb, S, dh), lambda b: (b, 0, 0))
    ce = pl.CostEstimate(
        flops=4 * BH * S * S * dh,
        transcendentals=BH * S * S,
        bytes_accessed=4 * BH * S * dh * qkv_bytes)

    return pl.pallas_call(
        _attn_kernel,
        out_shape=jax.ShapeDtypeStruct((BH, S, dh), out_dtype),
        grid_spec=pltpu.PrefetchScalarGridSpec(
            num_scalar_prefetch=0,
            grid=grid,
            in_specs=[spec, spec, spec],
            out_specs=pl.BlockSpec((hb, S, dh), lambda b: (b, 0, 0)),
        ),
        compiler_params=pltpu.CompilerParams(
            dimension_semantics=("parallel",),
            vmem_limit_bytes=_vmem_limit_bytes(cap)),
        cost_estimate=ce,
    )(q, k, v)


# ---------------------------------------------------------------------------
# Kernel 3: output projection + residual + LayerNorm (fused), row-tiled,
# bf16 weight resident across grid steps (same block index every step).
# ---------------------------------------------------------------------------
def _out_ln_kernel(ctx_ref, w_ref, b_ref, x_ref, g_ref, beta_ref, o_ref, *, eps):
    y = jnp.dot(ctx_ref[...].astype(jnp.bfloat16), w_ref[...],
                preferred_element_type=jnp.float32)
    y = y + b_ref[...] + x_ref[...].astype(jnp.float32)   # bias + residual
    mean = jnp.mean(y, axis=-1, keepdims=True)
    var = jnp.mean(jnp.square(y - mean), axis=-1, keepdims=True)
    yn = (y - mean) * jax.lax.rsqrt(var + eps)
    o_ref[...] = (yn * g_ref[...] + beta_ref[...]).astype(o_ref.dtype)


def pallas_out_ln(ctx2d, w, b, x2d, gamma, beta, eps=1e-5):
    """ctx2d: [M, D] (bf16 ok); w: [D, D]; b/gamma/beta: [D]; x2d: [M, D]."""
    M, D = ctx2d.shape
    cap = _tpu_vmem_capacity_bytes()
    tm_target = 512 if D < 1024 else 256   # keep resident weight + tiles in VMEM
    tm = _pick_tile(M, tm_target, 16)
    grid = (M // tm,)

    wb = w.astype(jnp.bfloat16)            # resident bf16 weight (half VMEM/DMA)
    kernel = functools.partial(_out_ln_kernel, eps=eps)
    ce = pl.CostEstimate(
        flops=2 * M * D * D + 8 * M * D,
        transcendentals=M,
        bytes_accessed=2 * M * D + 2 * D * D + 4 * M * D + 4 * M * D + 3 * 4 * D)

    return pl.pallas_call(
        kernel,
        out_shape=jax.ShapeDtypeStruct((M, D), x2d.dtype),
        grid_spec=pltpu.PrefetchScalarGridSpec(
            num_scalar_prefetch=0,
            grid=grid,
            in_specs=[
                pl.BlockSpec((tm, D), lambda i: (i, 0)),
                pl.BlockSpec((D, D), lambda i: (0, 0)),   # weight resident
                pl.BlockSpec((1, D), lambda i: (0, 0)),
                pl.BlockSpec((tm, D), lambda i: (i, 0)),
                pl.BlockSpec((1, D), lambda i: (0, 0)),
                pl.BlockSpec((1, D), lambda i: (0, 0)),
            ],
            out_specs=pl.BlockSpec((tm, D), lambda i: (i, 0)),
        ),
        compiler_params=pltpu.CompilerParams(
            dimension_semantics=("parallel",),
            vmem_limit_bytes=_vmem_limit_bytes(cap)),
        cost_estimate=ce,
    )(ctx2d, wb, b.reshape(1, D).astype(jnp.float32), x2d,
      gamma.reshape(1, D).astype(jnp.float32),
      beta.reshape(1, D).astype(jnp.float32))


# ---------------------------------------------------------------------------
# Parameter init (deterministic, PyTorch-Linear-style uniform bounds)
# ---------------------------------------------------------------------------
def init_params(key, dim_model):
    bound = 1.0 / (dim_model ** 0.5)
    keys = jax.random.split(key, 8)

    def lin(kw, kb):
        w = jax.random.uniform(kw, (dim_model, dim_model), jnp.float32, -bound, bound)
        b = jax.random.uniform(kb, (dim_model,), jnp.float32, -bound, bound)
        return w, b

    wq, bq = lin(keys[0], keys[1])
    wk, bk = lin(keys[2], keys[3])
    wv, bv = lin(keys[4], keys[5])
    wo, bo = lin(keys[6], keys[7])
    gamma = jnp.ones((dim_model,), jnp.float32)   # LayerNorm weight init
    beta = jnp.zeros((dim_model,), jnp.float32)   # LayerNorm bias init
    return dict(wq=wq, bq=bq, wk=wk, bk=bk, wv=wv, bv=bv,
                wo=wo, bo=bo, gamma=gamma, beta=beta)


# ---------------------------------------------------------------------------
# Forward pass matching Multi_Head_Attention.forward
# ---------------------------------------------------------------------------
def multi_head_attention(x, params, num_head):
    B, S, D = x.shape
    dim_head = D // num_head
    x2d = x.reshape(B * S, D)
    scale = float(dim_head) ** (-0.5)

    # One fused pass over x -> Q, K, V as three bf16 outputs (no packed-buffer
    # column slicing in the wrapper -> no extra HBM round trip).
    Q, K, V = pallas_qkv_proj(x2d, params["wq"], params["wk"], params["wv"],
                              params["bq"], params["bk"], params["bv"], scale)

    # Same (quirky) head split as torch .view(batch*num_head, -1, dim_head)
    # (contiguous row-major reshape -> free).
    Q = Q.reshape(B * num_head, -1, dim_head)
    K = K.reshape(B * num_head, -1, dim_head)
    V = V.reshape(B * num_head, -1, dim_head)

    context = pallas_attention(Q, K, V)
    context = context.reshape(B * S, D)

    # fc + dropout(p=0.0, identity) + residual + layer_norm, fused
    out = pallas_out_ln(context, params["wo"], params["bo"], x2d,
                        params["gamma"], params["beta"])
    return out.reshape(B, S, D)


# ---------------------------------------------------------------------------
# Pure-JAX f32 reference (mirrors the PyTorch forward) for a sanity check
# ---------------------------------------------------------------------------
def reference(x, params, num_head):
    B, S, D = x.shape
    dim_head = D // num_head
    Q = x @ params["wq"] + params["bq"]
    K = x @ params["wk"] + params["bk"]
    V = x @ params["wv"] + params["bv"]
    Q = Q.reshape(B * num_head, -1, dim_head)
    K = K.reshape(B * num_head, -1, dim_head)
    V = V.reshape(B * num_head, -1, dim_head)
    scale = float(dim_head) ** (-0.5)
    attn = jnp.einsum("bqd,bkd->bqk", Q, K) * scale
    attn = jax.nn.softmax(attn, axis=-1)
    ctx = jnp.einsum("bqk,bkd->bqd", attn, V).reshape(B, S, D)
    out = ctx @ params["wo"] + params["bo"] + x
    mean = jnp.mean(out, axis=-1, keepdims=True)
    var = jnp.mean(jnp.square(out - mean), axis=-1, keepdims=True)
    out = (out - mean) * jax.lax.rsqrt(var + 1e-5)
    return out * params["gamma"] + params["beta"]


if __name__ == "__main__":
    B, S, D, num_head = 2, 8, 32, 4
    key = jax.random.PRNGKey(0)
    kx, kp = jax.random.split(key)
    x = jax.random.normal(kx, (B, S, D), jnp.float32)
    params = init_params(kp, D)

    fwd = jax.jit(functools.partial(multi_head_attention, num_head=num_head))
    out = jax.block_until_ready(fwd(x, params))

    ref = reference(x, params, num_head)
    assert out.shape == (B, S, D)
    # bf16 MXU operands (f32 accumulation) + approx EUP reciprocal in the
    # softmax -> ~1e-2-level deviation vs the pure-f32 reference.
    assert jnp.allclose(out, ref, atol=5e-2, rtol=5e-2), "mismatch vs reference"
    print("KERNEL_OK")
</pallas_src>

<mosaic_0001>
module attributes {stable_mosaic.version = 11 : i64} {
  func.func @_qkv_kernel(%arg0: i32, %arg1: i32, %arg2: i32, %arg3: memref<16x32xf32, #tpu.memory_space<vmem>>, %arg4: memref<32x32xbf16, #tpu.memory_space<vmem>>, %arg5: memref<32x32xbf16, #tpu.memory_space<vmem>>, %arg6: memref<32x32xbf16, #tpu.memory_space<vmem>>, %arg7: memref<1x32xf32, #tpu.memory_space<vmem>>, %arg8: memref<1x32xf32, #tpu.memory_space<vmem>>, %arg9: memref<1x32xf32, #tpu.memory_space<vmem>>, %arg10: memref<16x32xbf16, #tpu.memory_space<vmem>>, %arg11: memref<16x32xbf16, #tpu.memory_space<vmem>>, %arg12: memref<16x32xbf16, #tpu.memory_space<vmem>>, %arg13: memref<16x32xf32, #tpu.memory_space<vmem>>, %arg14: memref<16x32xf32, #tpu.memory_space<vmem>>, %arg15: memref<16x32xf32, #tpu.memory_space<vmem>>) attributes {dimension_semantics = [#tpu.dimension_semantics<parallel>, #tpu.dimension_semantics<parallel>, #tpu.dimension_semantics<arbitrary>], iteration_bounds = array<i64: 1, 1, 1>, scalar_prefetch = 0 : i64, scratch_operands = 3 : i64, tpu.core_type = #tpu.core_type<tc>, window_params = [{transform_indices = @transform_0, window_bounds = array<i64: 16, 32>}, {transform_indices = @transform_1, window_bounds = array<i64: 32, 32>}, {transform_indices = @transform_2, window_bounds = array<i64: 32, 32>}, {transform_indices = @transform_3, window_bounds = array<i64: 32, 32>}, {transform_indices = @transform_4, window_bounds = array<i64: 1, 32>}, {transform_indices = @transform_5, window_bounds = array<i64: 1, 32>}, {transform_indices = @transform_6, window_bounds = array<i64: 1, 32>}, {transform_indices = @transform_7, window_bounds = array<i64: 16, 32>}, {transform_indices = @transform_8, window_bounds = array<i64: 16, 32>}, {transform_indices = @transform_9, window_bounds = array<i64: 16, 32>}]} {
    %c0_i32 = arith.constant 0 : i32
    %0 = arith.cmpi eq, %arg2, %c0_i32 : i32
    %1 = arith.extui %0 : i1 to i32
    %c0_i32_0 = arith.constant 0 : i32
    %2 = arith.cmpi ne, %1, %c0_i32_0 : i32
    scf.if %2 {
      %cst_24 = arith.constant 0.000000e+00 : f32
      %23 = vector.broadcast %cst_24 : f32 to vector<16x32xf32>
      %c0_25 = arith.constant 0 : index
      %c0_26 = arith.constant 0 : index
      %24 = vector.load %arg13[%c0_25, %c0_26] : memref<16x32xf32, #tpu.memory_space<vmem>>, vector<16x32xf32>
      tpu.vector_store %arg13[%c0_25, %c0_26], %23 {strides = array<i32>} : memref<16x32xf32, #tpu.memory_space<vmem>>, vector<16x32xf32>,
      %cst_27 = arith.constant 0.000000e+00 : f32
      %25 = vector.broadcast %cst_27 : f32 to vector<16x32xf32>
      %c0_28 = arith.constant 0 : index
      %c0_29 = arith.constant 0 : index
      %26 = vector.load %arg14[%c0_28, %c0_29] : memref<16x32xf32, #tpu.memory_space<vmem>>, vector<16x32xf32>
      tpu.vector_store %arg14[%c0_28, %c0_29], %25 {strides = array<i32>} : memref<16x32xf32, #tpu.memory_space<vmem>>, vector<16x32xf32>,
      %cst_30 = arith.constant 0.000000e+00 : f32
      %27 = vector.broadcast %cst_30 : f32 to vector<16x32xf32>
      %c0_31 = arith.constant 0 : index
      %c0_32 = arith.constant 0 : index
      %28 = vector.load %arg15[%c0_31, %c0_32] : memref<16x32xf32, #tpu.memory_space<vmem>>, vector<16x32xf32>
      tpu.vector_store %arg15[%c0_31, %c0_32], %27 {strides = array<i32>} : memref<16x32xf32, #tpu.memory_space<vmem>>, vector<16x32xf32>,
    } else {
    }
    %c0 = arith.constant 0 : index
    %c0_1 = arith.constant 0 : index
    %3 = vector.load %arg3[%c0, %c0_1] : memref<16x32xf32, #tpu.memory_space<vmem>>, vector<16x32xf32>
    %4 = arith.truncf %3 : vector<16x32xf32> to vector<16x32xbf16>
    %c0_2 = arith.constant 0 : index
    %c0_3 = arith.constant 0 : index
    %5 = vector.load %arg13[%c0_2, %c0_3] : memref<16x32xf32, #tpu.memory_space<vmem>>, vector<16x32xf32>
    %c0_4 = arith.constant 0 : index
    %c0_5 = arith.constant 0 : index
    %6 = vector.load %arg4[%c0_4, %c0_5] : memref<32x32xbf16, #tpu.memory_space<vmem>>, vector<32x32xbf16>
    %cst = arith.constant dense<0.000000e+00> : vector<16x32xf32>
    %7 = tpu.matmul %4, %6, %cst {dimension_numbers = #tpu.dot_dimension_numbers<[1], [0], [0], [1], [0, 0, 1, 1], [], []>} : vector<16x32xbf16>, vector<32x32xbf16>, vector<16x32xf32> -> vector<16x32xf32>
    %8 = arith.addf %5, %7 : vector<16x32xf32>
    %c0_6 = arith.constant 0 : index
    %c0_7 = arith.constant 0 : index
    %9 = vector.load %arg13[%c0_6, %c0_7] : memref<16x32xf32, #tpu.memory_space<vmem>>, vector<16x32xf32>
    tpu.vector_store %arg13[%c0_6, %c0_7], %8 {strides = array<i32>} : memref<16x32xf32, #tpu.memory_space<vmem>>, vector<16x32xf32>,
    %c0_8 = arith.constant 0 : index
    %c0_9 = arith.constant 0 : index
    %10 = vector.load %arg14[%c0_8, %c0_9] : memref<16x32xf32, #tpu.memory_space<vmem>>, vector<16x32xf32>
    %c0_10 = arith.constant 0 : index
    %c0_11 = arith.constant 0 : index
    %11 = vector.load %arg5[%c0_10, %c0_11] : memref<32x32xbf16, #tpu.memory_space<vmem>>, vector<32x32xbf16>
    %cst_12 = arith.constant dense<0.000000e+00> : vector<16x32xf32>
    %12 = tpu.matmul %4, %11, %cst_12 {dimension_numbers = #tpu.dot_dimension_numbers<[1], [0], [0], [1], [0, 0, 1, 1], [], []>} : vector<16x32xbf16>, vector<32x32xbf16>, vector<16x32xf32> -> vector<16x32xf32>
    %13 = arith.addf %10, %12 : vector<16x32xf32>
    %c0_13 = arith.constant 0 : index
    %c0_14 = arith.constant 0 : index
    %14 = vector.load %arg14[%c0_13, %c0_14] : memref<16x32xf32, #tpu.memory_space<vmem>>, vector<16x32xf32>
    tpu.vector_store %arg14[%c0_13, %c0_14], %13 {strides = array<i32>} : memref<16x32xf32, #tpu.memory_space<vmem>>, vector<16x32xf32>,
    %c0_15 = arith.constant 0 : index
    %c0_16 = arith.constant 0 : index
    %15 = vector.load %arg15[%c0_15, %c0_16] : memref<16x32xf32, #tpu.memory_space<vmem>>, vector<16x32xf32>
    %c0_17 = arith.constant 0 : index
    %c0_18 = arith.constant 0 : index
    %16 = vector.load %arg6[%c0_17, %c0_18] : memref<32x32xbf16, #tpu.memory_space<vmem>>, vector<32x32xbf16>
    %cst_19 = arith.constant dense<0.000000e+00> : vector<16x32xf32>
    %17 = tpu.matmul %4, %16, %cst_19 {dimension_numbers = #tpu.dot_dimension_numbers<[1], [0], [0], [1], [0, 0, 1, 1], [], []>} : vector<16x32xbf16>, vector<32x32xbf16>, vector<16x32xf32> -> vector<16x32xf32>
    %18 = arith.addf %15, %17 : vector<16x32xf32>
    %c0_20 = arith.constant 0 : index
    %c0_21 = arith.constant 0 : index
    %19 = vector.load %arg15[%c0_20, %c0_21] : memref<16x32xf32, #tpu.memory_space<vmem>>, vector<16x32xf32>
    tpu.vector_store %arg15[%c0_20, %c0_21], %18 {strides = array<i32>} : memref<16x32xf32, #tpu.memory_space<vmem>>, vector<16x32xf32>,
    %c0_i32_22 = arith.constant 0 : i32
    %20 = arith.cmpi eq, %arg2, %c0_i32_22 : i32
    %21 = arith.extui %20 : i1 to i32
    %c0_i32_23 = arith.constant 0 : i32
    %22 = arith.cmpi ne, %21, %c0_i32_23 : i32
    scf.if %22 {
      %c0_24 = arith.constant 0 : index
      %c0_25 = arith.constant 0 : index
      %23 = vector.load %arg13[%c0_24, %c0_25] : memref<16x32xf32, #tpu.memory_space<vmem>>, vector<16x32xf32>
      %c0_26 = arith.constant 0 : index
      %c0_27 = arith.constant 0 : index
      %24 = vector.load %arg7[%c0_26, %c0_27] : memref<1x32xf32, #tpu.memory_space<vmem>>, vector<1x32xf32>
      %25 = vector.broadcast %24 : vector<1x32xf32> to vector<16x32xf32>
      %26 = arith.addf %23, %25 : vector<16x32xf32>
      %cst_28 = arith.constant 0.353553385 : f32
      %27 = vector.broadcast %cst_28 : f32 to vector<16x32xf32>
      %28 = arith.mulf %26, %27 : vector<16x32xf32>
      %29 = arith.truncf %28 : vector<16x32xf32> to vector<16x32xbf16>
      %c0_29 = arith.constant 0 : index
      %c0_30 = arith.constant 0 : index
      %30 = vector.load %arg10[%c0_29, %c0_30] : memref<16x32xbf16, #tpu.memory_space<vmem>>, vector<16x32xbf16>
      tpu.vector_store %arg10[%c0_29, %c0_30], %29 {strides = array<i32>} : memref<16x32xbf16, #tpu.memory_space<vmem>>, vector<16x32xbf16>,
      %c0_31 = arith.constant 0 : index
      %c0_32 = arith.constant 0 : index
      %31 = vector.load %arg14[%c0_31, %c0_32] : memref<16x32xf32, #tpu.memory_space<vmem>>, vector<16x32xf32>
      %c0_33 = arith.constant 0 : index
      %c0_34 = arith.constant 0 : index
      %32 = vector.load %arg8[%c0_33, %c0_34] : memref<1x32xf32, #tpu.memory_space<vmem>>, vector<1x32xf32>
      %33 = vector.broadcast %32 : vector<1x32xf32> to vector<16x32xf32>
      %34 = arith.addf %31, %33 : vector<16x32xf32>
      %35 = arith.truncf %34 : vector<16x32xf32> to vector<16x32xbf16>
      %c0_35 = arith.constant 0 : index
      %c0_36 = arith.constant 0 : index
      %36 = vector.load %arg11[%c0_35, %c0_36] : memref<16x32xbf16, #tpu.memory_space<vmem>>, vector<16x32xbf16>
      tpu.vector_store %arg11[%c0_35, %c0_36], %35 {strides = array<i32>} : memref<16x32xbf16, #tpu.memory_space<vmem>>, vector<16x32xbf16>,
      %c0_37 = arith.constant 0 : index
      %c0_38 = arith.constant 0 : index
      %37 = vector.load %arg15[%c0_37, %c0_38] : memref<16x32xf32, #tpu.memory_space<vmem>>, vector<16x32xf32>
      %c0_39 = arith.constant 0 : index
      %c0_40 = arith.constant 0 : index
      %38 = vector.load %arg9[%c0_39, %c0_40] : memref<1x32xf32, #tpu.memory_space<vmem>>, vector<1x32xf32>
      %39 = vector.broadcast %38 : vector<1x32xf32> to vector<16x32xf32>
      %40 = arith.addf %37, %39 : vector<16x32xf32>
      %41 = arith.truncf %40 : vector<16x32xf32> to vector<16x32xbf16>
      %c0_41 = arith.constant 0 : index
      %c0_42 = arith.constant 0 : index
      %42 = vector.load %arg12[%c0_41, %c0_42] : memref<16x32xbf16, #tpu.memory_space<vmem>>, vector<16x32xbf16>
      tpu.vector_store %arg12[%c0_41, %c0_42], %41 {strides = array<i32>} : memref<16x32xbf16, #tpu.memory_space<vmem>>, vector<16x32xbf16>,
    } else {
    }
    return
  }
  func.func @transform_0(%arg0: i32, %arg1: i32, %arg2: i32) -> (i32, i32) {
    %c0_i32 = arith.constant 0 : i32
    return %arg0, %arg2 : i32, i32
  }
  func.func @transform_1(%arg0: i32, %arg1: i32, %arg2: i32) -> (i32, i32) {
    %c0_i32 = arith.constant 0 : i32
    return %arg2, %arg1 : i32, i32
  }
  func.func @transform_2(%arg0: i32, %arg1: i32, %arg2: i32) -> (i32, i32) {
    %c0_i32 = arith.constant 0 : i32
    return %arg2, %arg1 : i32, i32
  }
  func.func @transform_3(%arg0: i32, %arg1: i32, %arg2: i32) -> (i32, i32) {
    %c0_i32 = arith.constant 0 : i32
    return %arg2, %arg1 : i32, i32
  }
  func.func @transform_4(%arg0: i32, %arg1: i32, %arg2: i32) -> (i32, i32) {
    %c0_i32 = arith.constant 0 : i32
    %c0_i32_0 = arith.constant 0 : i32
    return %c0_i32, %arg1 : i32, i32
  }
  func.func @transform_5(%arg0: i32, %arg1: i32, %arg2: i32) -> (i32, i32) {
    %c0_i32 = arith.constant 0 : i32
    %c0_i32_0 = arith.constant 0 : i32
    return %c0_i32, %arg1 : i32, i32
  }
  func.func @transform_6(%arg0: i32, %arg1: i32, %arg2: i32) -> (i32, i32) {
    %c0_i32 = arith.constant 0 : i32
    %c0_i32_0 = arith.constant 0 : i32
    return %c0_i32, %arg1 : i32, i32
  }
  func.func @transform_7(%arg0: i32, %arg1: i32, %arg2: i32) -> (i32, i32) {
    %c0_i32 = arith.constant 0 : i32
    return %arg0, %arg1 : i32, i32
  }
  func.func @transform_8(%arg0: i32, %arg1: i32, %arg2: i32) -> (i32, i32) {
    %c0_i32 = arith.constant 0 : i32
    return %arg0, %arg1 : i32, i32
  }
  func.func @transform_9(%arg0: i32, %arg1: i32, %arg2: i32) -> (i32, i32) {
    %c0_i32 = arith.constant 0 : i32
    return %arg0, %arg1 : i32, i32
  }
}

module attributes {stable_mosaic.version = 11 : i64} {
  func.func @_out_ln_kernel(%arg0: i32, %arg1: memref<16x32xbf16, #tpu.memory_space<vmem>>, %arg2: memref<32x32xbf16, #tpu.memory_space<vmem>>, %arg3: memref<1x32xf32, #tpu.memory_space<vmem>>, %arg4: memref<16x32xf32, #tpu.memory_space<vmem>>, %arg5: memref<1x32xf32, #tpu.memory_space<vmem>>, %arg6: memref<1x32xf32, #tpu.memory_space<vmem>>, %arg7: memref<16x32xf32, #tpu.memory_space<vmem>>) attributes {dimension_semantics = [#tpu.dimension_semantics<parallel>], iteration_bounds = array<i64: 1>, scalar_prefetch = 0 : i64, scratch_operands = 0 : i64, tpu.core_type = #tpu.core_type<tc>, window_params = [{transform_indices = @transform_0, window_bounds = array<i64: 16, 32>}, {pipeline_mode = #tpu.pipeline_mode<synchronous>, transform_indices = @transform_1, window_bounds = array<i64: 32, 32>}, {pipeline_mode = #tpu.pipeline_mode<synchronous>, transform_indices = @transform_2, window_bounds = array<i64: 1, 32>}, {transform_indices = @transform_3, window_bounds = array<i64: 16, 32>}, {pipeline_mode = #tpu.pipeline_mode<synchronous>, transform_indices = @transform_4, window_bounds = array<i64: 1, 32>}, {pipeline_mode = #tpu.pipeline_mode<synchronous>, transform_indices = @transform_5, window_bounds = array<i64: 1, 32>}, {transform_indices = @transform_6, window_bounds = array<i64: 16, 32>}]} {
    %c0 = arith.constant 0 : index
    %c0_0 = arith.constant 0 : index
    %0 = vector.load %arg1[%c0, %c0_0] : memref<16x32xbf16, #tpu.memory_space<vmem>>, vector<16x32xbf16>
    %c0_1 = arith.constant 0 : index
    %c0_2 = arith.constant 0 : index
    %1 = vector.load %arg2[%c0_1, %c0_2] : memref<32x32xbf16, #tpu.memory_space<vmem>>, vector<32x32xbf16>
    %cst = arith.constant dense<0.000000e+00> : vector<16x32xf32>
    %2 = tpu.matmul %0, %1, %cst {dimension_numbers = #tpu.dot_dimension_numbers<[1], [0], [0], [1], [0, 0, 1, 1], [], []>} : vector<16x32xbf16>, vector<32x32xbf16>, vector<16x32xf32> -> vector<16x32xf32>
    %c0_3 = arith.constant 0 : index
    %c0_4 = arith.constant 0 : index
    %3 = vector.load %arg3[%c0_3, %c0_4] : memref<1x32xf32, #tpu.memory_space<vmem>>, vector<1x32xf32>
    %4 = vector.broadcast %3 : vector<1x32xf32> to vector<16x32xf32>
    %5 = arith.addf %2, %4 : vector<16x32xf32>
    %c0_5 = arith.constant 0 : index
    %c0_6 = arith.constant 0 : index
    %6 = vector.load %arg4[%c0_5, %c0_6] : memref<16x32xf32, #tpu.memory_space<vmem>>, vector<16x32xf32>
    %7 = arith.addf %5, %6 : vector<16x32xf32>
    %cst_7 = arith.constant dense<0.000000e+00> : vector<16xf32>
    %8 = vector.multi_reduction <add>, %7, %cst_7 [1] : vector<16x32xf32> to vector<16xf32>
    %9 = vector.shape_cast %8 : vector<16xf32> to vector<16x1xf32>
    %cst_8 = arith.constant 3.200000e+01 : f32
    %10 = vector.broadcast %cst_8 : f32 to vector<16x1xf32>
    %11 = arith.divf %9, %10 : vector<16x1xf32>
    %12 = vector.broadcast %11 : vector<16x1xf32> to vector<16x32xf32>
    %13 = arith.subf %7, %12 : vector<16x32xf32>
    %14 = arith.mulf %13, %13 : vector<16x32xf32>
    %cst_9 = arith.constant dense<0.000000e+00> : vector<16xf32>
    %15 = vector.multi_reduction <add>, %14, %cst_9 [1] : vector<16x32xf32> to vector<16xf32>
    %16 = vector.shape_cast %15 : vector<16xf32> to vector<16x1xf32>
    %cst_10 = arith.constant 3.200000e+01 : f32
    %17 = vector.broadcast %cst_10 : f32 to vector<16x1xf32>
    %18 = arith.divf %16, %17 : vector<16x1xf32>
    %19 = vector.broadcast %11 : vector<16x1xf32> to vector<16x32xf32>
    %20 = arith.subf %7, %19 : vector<16x32xf32>
    %cst_11 = arith.constant 9.99999974E-6 : f32
    %21 = vector.broadcast %cst_11 : f32 to vector<16x1xf32>
    %22 = arith.addf %18, %21 : vector<16x1xf32>
    %23 = math.rsqrt %22 : vector<16x1xf32>
    %24 = vector.broadcast %23 : vector<16x1xf32> to vector<16x32xf32>
    %25 = arith.mulf %20, %24 : vector<16x32xf32>
    %c0_12 = arith.constant 0 : index
    %c0_13 = arith.constant 0 : index
    %26 = vector.load %arg5[%c0_12, %c0_13] : memref<1x32xf32, #tpu.memory_space<vmem>>, vector<1x32xf32>
    %27 = vector.broadcast %26 : vector<1x32xf32> to vector<16x32xf32>
    %28 = arith.mulf %25, %27 : vector<16x32xf32>
    %c0_14 = arith.constant 0 : index
    %c0_15 = arith.constant 0 : index
    %29 = vector.load %arg6[%c0_14, %c0_15] : memref<1x32xf32, #tpu.memory_space<vmem>>, vector<1x32xf32>
    %30 = vector.broadcast %29 : vector<1x32xf32> to vector<16x32xf32>
    %31 = arith.addf %28, %30 : vector<16x32xf32>
    %c0_16 = arith.constant 0 : index
    %c0_17 = arith.constant 0 : index
    %32 = vector.load %arg7[%c0_16, %c0_17] : memref<16x32xf32, #tpu.memory_space<vmem>>, vector<16x32xf32>
    tpu.vector_store %arg7[%c0_16, %c0_17], %31 {strides = array<i32>} : memref<16x32xf32, #tpu.memory_space<vmem>>, vector<16x32xf32>,
    return
  }
  func.func @transform_0(%arg0: i32) -> (i32, i32) {
    %c0_i32 = arith.constant 0 : i32
    %c0_i32_0 = arith.constant 0 : i32
    return %arg0, %c0_i32 : i32, i32
  }
  func.func @transform_1(%arg0: i32) -> (i32, i32) {
    %c0_i32 = arith.constant 0 : i32
    %c0_i32_0 = arith.constant 0 : i32
    %c0_i32_1 = arith.constant 0 : i32
    return %c0_i32, %c0_i32_0 : i32, i32
  }
  func.func @transform_2(%arg0: i32) -> (i32, i32) {
    %c0_i32 = arith.constant 0 : i32
    %c0_i32_0 = arith.constant 0 : i32
    %c0_i32_1 = arith.constant 0 : i32
    return %c0_i32, %c0_i32_0 : i32, i32
  }
  func.func @transform_3(%arg0: i32) -> (i32, i32) {
    %c0_i32 = arith.constant 0 : i32
    %c0_i32_0 = arith.constant 0 : i32
    return %arg0, %c0_i32 : i32, i32
  }
  func.func @transform_4(%arg0: i32) -> (i32, i32) {
    %c0_i32 = arith.constant 0 : i32
    %c0_i32_0 = arith.constant 0 : i32
    %c0_i32_1 = arith.constant 0 : i32
    return %c0_i32, %c0_i32_0 : i32, i32
  }
  func.func @transform_5(%arg0: i32) -> (i32, i32) {
    %c0_i32 = arith.constant 0 : i32
    %c0_i32_0 = arith.constant 0 : i32
    %c0_i32_1 = arith.constant 0 : i32
    return %c0_i32, %c0_i32_0 : i32, i32
  }
  func.func @transform_6(%arg0: i32) -> (i32, i32) {
    %c0_i32 = arith.constant 0 : i32
    %c0_i32_0 = arith.constant 0 : i32
    return %arg0, %c0_i32 : i32, i32
  }
}

module attributes {stable_mosaic.version = 11 : i64} {
  func.func @_attn_kernel(%arg0: i32, %arg1: memref<4x8x8xbf16, #tpu.memory_space<vmem>>, %arg2: memref<4x8x8xbf16, #tpu.memory_space<vmem>>, %arg3: memref<4x8x8xbf16, #tpu.memory_space<vmem>>, %arg4: memref<4x8x8xbf16, #tpu.memory_space<vmem>>) attributes {dimension_semantics = [#tpu.dimension_semantics<parallel>], iteration_bounds = array<i64: 2>, scalar_prefetch = 0 : i64, scratch_operands = 0 : i64, tpu.core_type = #tpu.core_type<tc>, window_params = [{transform_indices = @transform_0, window_bounds = array<i64: 4, 8, 8>}, {transform_indices = @transform_1, window_bounds = array<i64: 4, 8, 8>}, {transform_indices = @transform_2, window_bounds = array<i64: 4, 8, 8>}, {transform_indices = @transform_3, window_bounds = array<i64: 4, 8, 8>}]} {
    %c0 = arith.constant 0 : index
    %c0_0 = arith.constant 0 : index
    %c0_1 = arith.constant 0 : index
    %0 = vector.load %arg1[%c0, %c0_0, %c0_1] : memref<4x8x8xbf16, #tpu.memory_space<vmem>>, vector<4x8x8xbf16>
    %c0_2 = arith.constant 0 : index
    %c0_3 = arith.constant 0 : index
    %c0_4 = arith.constant 0 : index
    %1 = vector.load %arg2[%c0_2, %c0_3, %c0_4] : memref<4x8x8xbf16, #tpu.memory_space<vmem>>, vector<4x8x8xbf16>
    "tpu.trace_start"() <{level = 10 : i32, message = "bqd,bkd->bqk"}> : () -> ()
    %cst = arith.constant dense<0.000000e+00> : vector<4x8x8xf32>
    %2 = tpu.matmul %0, %1, %cst {dimension_numbers = #tpu.dot_dimension_numbers<[2], [2], [1], [1], [0, 0, 0, 1, 1, 1], [0], [0]>} : vector<4x8x8xbf16>, vector<4x8x8xbf16>, vector<4x8x8xf32> -> vector<4x8x8xf32>
    "tpu.trace_stop"() : () -> ()
    %cst_5 = arith.constant dense<0xFF800000> : vector<4x8xf32>
    %3 = vector.multi_reduction <maximumf>, %2, %cst_5 [2] : vector<4x8x8xf32> to vector<4x8xf32>
    %4 = vector.shape_cast %3 : vector<4x8xf32> to vector<4x8x1xf32>
    %5 = vector.broadcast %4 : vector<4x8x1xf32> to vector<4x8x8xf32>
    %6 = arith.subf %2, %5 : vector<4x8x8xf32>
    %7 = math.exp %6 : vector<4x8x8xf32>
    %cst_6 = arith.constant dense<0.000000e+00> : vector<4x8xf32>
    %8 = vector.multi_reduction <add>, %7, %cst_6 [2] : vector<4x8x8xf32> to vector<4x8xf32>
    %9 = vector.shape_cast %8 : vector<4x8xf32> to vector<4x8x1xf32>
    %10 = tpu.reciprocal %9 {approx = true} : vector<4x8x1xf32> -> vector<4x8x1xf32>
    %11 = vector.broadcast %10 : vector<4x8x1xf32> to vector<4x8x8xf32>
    %12 = arith.mulf %7, %11 : vector<4x8x8xf32>
    %13 = arith.truncf %12 : vector<4x8x8xf32> to vector<4x8x8xbf16>
    %c0_7 = arith.constant 0 : index
    %c0_8 = arith.constant 0 : index
    %c0_9 = arith.constant 0 : index
    %14 = vector.load %arg3[%c0_7, %c0_8, %c0_9] : memref<4x8x8xbf16, #tpu.memory_space<vmem>>, vector<4x8x8xbf16>
    "tpu.trace_start"() <{level = 10 : i32, message = "bqk,bkd->bqd"}> : () -> ()
    %cst_10 = arith.constant dense<0.000000e+00> : vector<4x8x8xf32>
    %15 = tpu.matmul %13, %14, %cst_10 {dimension_numbers = #tpu.dot_dimension_numbers<[2], [1], [1], [2], [0, 0, 0, 1, 1, 2], [0], [0]>} : vector<4x8x8xbf16>, vector<4x8x8xbf16>, vector<4x8x8xf32> -> vector<4x8x8xf32>
    "tpu.trace_stop"() : () -> ()
    %16 = arith.truncf %15 : vector<4x8x8xf32> to vector<4x8x8xbf16>
    %c0_11 = arith.constant 0 : index
    %c0_12 = arith.constant 0 : index
    %c0_13 = arith.constant 0 : index
    %17 = vector.load %arg4[%c0_11, %c0_12, %c0_13] : memref<4x8x8xbf16, #tpu.memory_space<vmem>>, vector<4x8x8xbf16>
    tpu.vector_store %arg4[%c0_11, %c0_12, %c0_13], %16 {strides = array<i32>} : memref<4x8x8xbf16, #tpu.memory_space<vmem>>, vector<4x8x8xbf16>,
    return
  }
  func.func @transform_0(%arg0: i32) -> (i32, i32, i32) {
    %c0_i32 = arith.constant 0 : i32
    %c0_i32_0 = arith.constant 0 : i32
    %c0_i32_1 = arith.constant 0 : i32
    return %arg0, %c0_i32, %c0_i32_0 : i32, i32, i32
  }
  func.func @transform_1(%arg0: i32) -> (i32, i32, i32) {
    %c0_i32 = arith.constant 0 : i32
    %c0_i32_0 = arith.constant 0 : i32
    %c0_i32_1 = arith.constant 0 : i32
    return %arg0, %c0_i32, %c0_i32_0 : i32, i32, i32
  }
  func.func @transform_2(%arg0: i32) -> (i32, i32, i32) {
    %c0_i32 = arith.constant 0 : i32
    %c0_i32_0 = arith.constant 0 : i32
    %c0_i32_1 = arith.constant 0 : i32
    return %arg0, %c0_i32, %c0_i32_0 : i32, i32, i32
  }
  func.func @transform_3(%arg0: i32) -> (i32, i32, i32) {
    %c0_i32 = arith.constant 0 : i32
    %c0_i32_0 = arith.constant 0 : i32
    %c0_i32_1 = arith.constant 0 : i32
    return %arg0, %c0_i32, %c0_i32_0 : i32, i32, i32
  }
}

</mosaic_0001>

<llo_original>
// kernel: multi_head_attention.5
$region0: #{multi_head_attention.5}
  #allocation0 [shape = 'u32[]', space=smem, size = 0x4, offset = 0x4, fixed_abs, tag = 'smem constant byte address 0x4 - core index']
  #allocation1 [shape = 'u32[144,128]{1,0:T(1,128)}', space=vmem, size = 0x12000, scoped, tag = 'internal scratch']
  %s0 = inlined_call_operand.vmem [shape: bf16[16,32], index: 0, kind: input, shape index: {}]
  %s1 = inlined_call_operand.vmem [shape: bf16[32,32], index: 1, kind: input, shape index: {}]
  %s2 = inlined_call_operand.vmem [shape: f32[1,32], index: 2, kind: input, shape index: {}]
  %s3 = inlined_call_operand.vmem [shape: f32[16,32], index: 3, kind: input, shape index: {}]
  %s4 = inlined_call_operand.vmem [shape: f32[1,32], index: 4, kind: input, shape index: {}]
  %s5 = inlined_call_operand.vmem [shape: f32[1,32], index: 5, kind: input, shape index: {}]
  %s6 = inlined_call_operand.hbm [shape: f32[16,32], index: 6, kind: output, shape index: {}]
  %s7 = sld [smem:[#allocation0]]
  $region34: #{multi_head_attention.5} parent=0
    _
  %s9 = ssub.s32 1, %s7
  %s10 = scalar_select 0, %s9, %s7
  $region1: #{multi_head_attention.5} parent=0
    #allocation2 [shape = 'u8[8192]{0}', space=vmem, size = 0x2000, scoped, tag = 'output window, operand 0, single buffered']
    #allocation3 [shape = 's32[1]{0}', space=sflag, size = 0x4, scoped, tag = 'scoped memory for multi_head_attention.5']
    %11 = vsyncpa [#allocation3], 0
    // Predicated region
    $region2: #{multi_head_attention.5} parent=1 // pred_check
      _
    $region3: #{multi_head_attention.5} parent=1 // pred_check_branch
      %13 = sbr.rel (0) target = $region5
    $region4: #{multi_head_attention.5} parent=1 // pred_region
      _
    $region5: #{multi_head_attention.5} parent=1 // pred_fallthru
      _
    // Predicated region
    $region6: #{multi_head_attention.5} parent=1 // pred_check
      _
    $region7: #{multi_head_attention.5} parent=1 // pred_check_branch
      %15 = sbr.rel (0) target = $region9
    $region8: #{multi_head_attention.5} parent=1 // pred_region
      _
    $region9: #{multi_head_attention.5} parent=1 // pred_fallthru
      _
    // Predicated region
    $region10: #{multi_head_attention.5} parent=1 // pred_check
      _
    $region11: #{multi_head_attention.5} parent=1 // pred_check_branch
      %17 = sbr.rel (0) target = $region13
    $region12: #{multi_head_attention.5} parent=1 // pred_region
      _
    $region13: #{multi_head_attention.5} parent=1 // pred_fallthru
      _
    // Predicated region
    $region14: #{multi_head_attention.5} parent=1 // pred_check
      _
    $region15: #{multi_head_attention.5} parent=1 // pred_check_branch
      %19 = sbr.rel (0) target = $region17
    $region16: #{multi_head_attention.5} parent=1 // pred_region
      _
    $region17: #{multi_head_attention.5} parent=1 // pred_fallthru
      _
    // Predicated region
    $region18: #{multi_head_attention.5} parent=1 // pred_check
      _
    $region19: #{multi_head_attention.5} parent=1 // pred_check_branch
      %21 = sbr.rel (0) target = $region21
    $region20: #{multi_head_attention.5} parent=1 // pred_region
      _
    $region21: #{multi_head_attention.5} parent=1 // pred_fallthru
      _
    // Predicated region
    $region22: #{multi_head_attention.5} parent=1 // pred_check
      _
    $region23: #{multi_head_attention.5} parent=1 // pred_check_branch
      %23 = sbr.rel (0) target = $region25
    $region24: #{multi_head_attention.5} parent=1 // pred_region
      _
    $region25: #{multi_head_attention.5} parent=1 // pred_fallthru
      _
    %v25 = vld [vmem:[%s0] sm:$0xf]
    %v26 = vld [vmem:[%s0 + $0x4] sm:$0xf]
    %v27 = vld [vmem:[%s1] sm:$0xf]
    %v28 = vld [vmem:[%s1 + $0x4] sm:$0xf]
    %v29 = vld [vmem:[%s1 + $0x8] sm:$0xf]
    %v30 = vld [vmem:[%s1 + $0xc] sm:$0xf]
    %v31 = vld [vmem:[%s2] sm:$0x1]
    %v33 = vlaneseq
    %v34 = vshrl.u32 %v33, 7
    %v35 = vsub.s32 0, %v34
    %v36 = vrot.slane %v31, %v35
    %v40 = vunpack.c.l.b16 %v25
    %v41 = vunpack.c.l.b16 %v26
    %v42 = vpack.c.b16 %v41, %v40
    %v47 = vunpack.c.l.b16 %v27
    %v48 = vunpack.c.l.b16 %v28
    %v49 = vunpack.c.l.b16 %v29
    %v50 = vunpack.c.l.b16 %v30
    %v51 = vpack.c.b16 %v48, %v47
    %v52 = vpack.c.b16 %v50, %v49
    %vm55 = vcmask 261120
    %v57 = vsel %vm55, %v42, 0
    %59 = vmatprep.subr.bf16.mxu0 0
    %60 = vmatpush1.bf16.msra.mxu0 0
    %61 = vmatprep.subr.bf16.mxu0 0
    %62 = vmatpush1.bf16.msra.mxu0 0
    %63 = vmatprep.subr.bf16.mxu0 0
    %64 = vmatpush1.bf16.msra.mxu0 0
    %65 = vmatprep.subr.bf16.mxu0 0
    %66 = vmatpush1.bf16.msra.mxu0 0
    %67 = vmatprep.subr.bf16.mxu0 0
    %68 = vmatpush1.bf16.msra.mxu0 0
    %69 = vmatprep.subr.bf16.mxu0 0
    %70 = vmatpush1.bf16.msra.mxu0 0
    %71 = vmatprep.subr.bf16.mxu0 0
    %72 = vmatpush1.bf16.msra.mxu0 %v52
    %73 = vmatprep.subr.bf16.mxu0 0
    %74 = vmatpush1.bf16.msra.mxu0 %v51
    %75 = vmatprep.subr.bf16.mxu0 0
    %76 = vmatpush2.bf16.msra.mxu0 0
    %77 = vmatprep.subr.bf16.mxu0 0
    %78 = vmatpush2.bf16.msra.mxu0 0
    %79 = vmatprep.subr.bf16.mxu0 0
    %80 = vmatpush2.bf16.msra.mxu0 0
    %81 = vmatprep.subr.bf16.mxu0 0
    %82 = vmatpush2.bf16.msra.mxu0 0
    %83 = vmatprep.subr.bf16.mxu0 0
    %84 = vmatpush2.bf16.msra.mxu0 0
    %85 = vmatprep.subr.bf16.mxu0 0
    %86 = vmatpush2.bf16.msra.mxu0 0
    %87 = vmatprep.subr.bf16.mxu0 0
    %88 = vmatpush2.bf16.msra.mxu0 0
    %89 = vmatprep.subr.bf16.mxu0 0
    %90 = vmatpush2.bf16.msra.mxu0 0
    %91 = vmatprep.mubr.bf16.mxu0 0
    %92 = vmatmul.mubr.bf16.gmra.mxu0 %v57
    %v93 = vpop.f32.mrf.mxu0
    %v94 = vadd.f32 %v36, %v93
    %v95 = vpop.f32.mrf.mxu0
    %v96 = vpop.f32.mrf.mxu0
    %v97 = vadd.f32 %v36, %v96
    %v98 = vpop.f32.mrf.mxu0
    %99 = vdwg.mxu0
    %v100 = vld [vmem:[%s3] sm:$0xff]
    %v101 = vld [vmem:[%s3 + $0x8] sm:$0xff]
    %v102 = vadd.f32 %v94, %v100
    %v103 = vadd.f32 %v97, %v101
    %v104 = vsel %vm55, %v102, 0.0
    %105 = vadd.xlane.f32.xlu0 %v104
    %v106 = vpop.xlane.xlu0 %105
    %v107 = vsel %vm55, %v103, 0.0
    %108 = vadd.xlane.f32.xlu0 %v107
    %v109 = vpop.xlane.xlu0 %108
    %v110 = vrcp.pop 32.0
    %v111 = vmul.f32 %v106, %v110
    %v112 = vmul.f32 %v109, %v110
    %v113 = vsub.f32 %v102, %v111
    %v114 = vsub.f32 %v103, %v112
    %v115 = vmul.f32 %v113, %v113
    %v116 = vmul.f32 %v114, %v114
    %v117 = vsel %vm55, %v115, 0.0
    %118 = vadd.xlane.f32.xlu0 %v117
    %v119 = vpop.xlane.xlu0 %118
    %v120 = vsel %vm55, %v116, 0.0
    %121 = vadd.xlane.f32.xlu0 %v120
    %v122 = vpop.xlane.xlu0 %121
    %v123 = vmul.f32 %v119, %v110
    %v124 = vmul.f32 %v122, %v110
    %v125 = vadd.f32 %v123, 1e-05
    %v126 = vadd.f32 %v124, 1e-05
    %v127 = vrsqrt.pop %v125
    %v128 = vrsqrt.pop %v126
    %v129 = vmul.f32 %v113, %v127
    %v130 = vmul.f32 %v114, %v128
    %v131 = vld [vmem:[%s4] sm:$0x1]
    %v133 = vlaneseq
    %v134 = vshrl.u32 %v133, 7
    %v135 = vsub.s32 0, %v134
    %v136 = vrot.slane %v131, %v135
    %v138 = vmul.f32 %v129, %v136
    %v139 = vmul.f32 %v130, %v136
    %v140 = vld [vmem:[%s5] sm:$0x1]
    %v142 = vlaneseq
    %v143 = vshrl.u32 %v142, 7
    %v144 = vsub.s32 0, %v143
    %v145 = vrot.slane %v140, %v144
    %v147 = vadd.f32 %v138, %v145
    %v148 = vadd.f32 %v139, %v145
    %149 = vst.msk [vmem:[#allocation2] sm:$0xff] %vm55, %v147
    %150 = vst.msk [vmem:[#allocation2 + $0x8] sm:$0xff] %vm55, %v148
    // Predicated region
    $region26: #{multi_head_attention.5} parent=1 // pred_check
      _
    $region27: #{multi_head_attention.5} parent=1 // pred_check_branch
      %152 = sbr.rel (0) target = $region29
    $region28: #{multi_head_attention.5} parent=1 // pred_region
      %s154 = ssub.s32 256, 256
      %155 = vsyncadd [#allocation3], %s154
      %s156 = sshll.u32 [#allocation2], 4
      %s157 = int_to_ptr.vmem [resolvable:$true] %s156
      %162 = dma.vmem_to_hbm [thread:$0]  %s157, 256, %s6, [#allocation3], 128, 128, 8
    $region29: #{multi_head_attention.5} parent=1 // pred_fallthru
      _
    // Predicated region
    $region30: #{multi_head_attention.5} parent=1 // pred_check
      _
    $region31: #{multi_head_attention.5} parent=1 // pred_check_branch
      %164 = sbr.rel (0) target = $region33
    $region32: #{multi_head_attention.5} parent=1 // pred_region
      %165 = dma.done [#allocation3], 256
    $region33: #{multi_head_attention.5} parent=1 // pred_fallthru
      _
    %166 = vsyncpa [#allocation3], 1

// kernel: multi_head_attention.3
$region0: #{multi_head_attention.3}
  #allocation0 [shape = 'u32[]', space=smem, size = 0x4, offset = 0x4, fixed_abs, tag = 'smem constant byte address 0x4 - core index']
  #allocation1 [shape = 'u32[144,128]{1,0:T(1,128)}', space=vmem, size = 0x12000, scoped, tag = 'internal scratch']
  #allocation2 [shape = 'f32[16,32]{1,0:T(8,128)}', space=vmem, size = 0x2000, scoped, tag = 'scratch operand']
  #allocation3 [shape = 'f32[16,32]{1,0:T(8,128)}', space=vmem, size = 0x2000, scoped, tag = 'scratch operand']
  #allocation4 [shape = 'f32[16,32]{1,0:T(8,128)}', space=vmem, size = 0x2000, scoped, tag = 'scratch operand']
  %s0 = inlined_call_operand.vmem [shape: f32[16,32], index: 0, kind: input, shape index: {}]
  %s1 = inlined_call_operand.vmem [shape: bf16[32,32], index: 1, kind: input, shape index: {}]
  %s2 = inlined_call_operand.vmem [shape: bf16[32,32], index: 2, kind: input, shape index: {}]
  %s3 = inlined_call_operand.vmem [shape: bf16[32,32], index: 3, kind: input, shape index: {}]
  %s4 = inlined_call_operand.vmem [shape: f32[1,32], index: 4, kind: input, shape index: {}]
  %s5 = inlined_call_operand.vmem [shape: f32[1,32], index: 5, kind: input, shape index: {}]
  %s6 = inlined_call_operand.vmem [shape: f32[1,32], index: 6, kind: input, shape index: {}]
  %s7 = inlined_call_operand.vmem [shape: bf16[16,32], index: 7, kind: output, shape index: {0}]
  %s8 = inlined_call_operand.vmem [shape: bf16[16,32], index: 8, kind: output, shape index: {1}]
  %s9 = inlined_call_operand.vmem [shape: bf16[16,32], index: 9, kind: output, shape index: {2}]
  %10 = xla_tuple %s7, %s8, %s9
  %s11 = sld [smem:[#allocation0]]
  $region62: #{multi_head_attention.3} parent=0
    _
  %s13 = ssub.s32 1, %s11
  %s14 = scalar_select 0, %s13, %s11
  // Predicated region
  $region2: #{multi_head_attention.3} parent=0 // pred_check
    _
  $region3: #{multi_head_attention.3} parent=0 // pred_check_branch
    %16 = sbr.rel (0) target = $region5
  $region4: #{multi_head_attention.3} parent=0 // pred_region
    _
  $region5: #{multi_head_attention.3} parent=0 // pred_fallthru
    _
  // Predicated region
  $region6: #{multi_head_attention.3} parent=0 // pred_check
    _
  $region7: #{multi_head_attention.3} parent=0 // pred_check_branch
    %18 = sbr.rel (0) target = $region9
  $region8: #{multi_head_attention.3} parent=0 // pred_region
    _
  $region9: #{multi_head_attention.3} parent=0 // pred_fallthru
    _
  // Predicated region
  $region10: #{multi_head_attention.3} parent=0 // pred_check
    _
  $region11: #{multi_head_attention.3} parent=0 // pred_check_branch
    %20 = sbr.rel (0) target = $region13
  $region12: #{multi_head_attention.3} parent=0 // pred_region
    _
  $region13: #{multi_head_attention.3} parent=0 // pred_fallthru
    _
  // Predicated region
  $region14: #{multi_head_attention.3} parent=0 // pred_check
    _
  $region15: #{multi_head_attention.3} parent=0 // pred_check_branch
    %22 = sbr.rel (0) target = $region17
  $region16: #{multi_head_attention.3} parent=0 // pred_region
    _
  $region17: #{multi_head_attention.3} parent=0 // pred_fallthru
    _
  // Predicated region
  $region18: #{multi_head_attention.3} parent=0 // pred_check
    _
  $region19: #{multi_head_attention.3} parent=0 // pred_check_branch
    %24 = sbr.rel (0) target = $region21
  $region20: #{multi_head_attention.3} parent=0 // pred_region
    _
  $region21: #{multi_head_attention.3} parent=0 // pred_fallthru
    _
  // Predicated region
  $region22: #{multi_head_attention.3} parent=0 // pred_check
    _
  $region23: #{multi_head_attention.3} parent=0 // pred_check_branch
    %26 = sbr.rel (0) target = $region25
  $region24: #{multi_head_attention.3} parent=0 // pred_region
    _
  $region25: #{multi_head_attention.3} parent=0 // pred_fallthru
    _
  // Predicated region
  $region26: #{multi_head_attention.3} parent=0 // pred_check
    _
  $region27: #{multi_head_attention.3} parent=0 // pred_check_branch
    %28 = sbr.rel (0) target = $region29
  $region28: #{multi_head_attention.3} parent=0 // pred_region
    _
  $region29: #{multi_head_attention.3} parent=0 // pred_fallthru
    _
  %p30 = scmp.eq.s32.totalorder 0, 0
  // Predicated region
  $region30: #{multi_head_attention.3} parent=0 // pred_check
    %p31 = pneg %p30
  $region31: #{multi_head_attention.3} parent=0 // pred_check_branch
    %33 = sbr.rel (%p31) target = $region33
  $region32: #{multi_head_attention.3} parent=0 // pred_region
    %vm34 = vcmask 261120
    %35 = vst.msk [vmem:[#allocation2] sm:$0xff] %vm34, 0.0
    %36 = vst.msk [vmem:[#allocation2 + $0x8] sm:$0xff] %vm34, 0.0
    %37 = vst.msk [vmem:[#allocation3] sm:$0xff] %vm34, 0.0
    %38 = vst.msk [vmem:[#allocation3 + $0x8] sm:$0xff] %vm34, 0.0
    %39 = vst.msk [vmem:[#allocation4] sm:$0xff] %vm34, 0.0
    %40 = vst.msk [vmem:[#allocation4 + $0x8] sm:$0xff] %vm34, 0.0
  $region33: #{multi_head_attention.3} parent=0 // pred_fallthru
    _
  %v41 = vld [vmem:[%s0] sm:$0xff]
  %v42 = vld [vmem:[%s0 + $0x8] sm:$0xff]
  %v43 = vpack.c.bf16 %v42, %v41
  %v44 = vld [vmem:[#allocation2] sm:$0xff]
  %v45 = vld [vmem:[#allocation2 + $0x8] sm:$0xff]
  %v46 = vld [vmem:[%s1] sm:$0xf]
  %v47 = vld [vmem:[%s1 + $0x4] sm:$0xf]
  %v48 = vld [vmem:[%s1 + $0x8] sm:$0xf]
  %v49 = vld [vmem:[%s1 + $0xc] sm:$0xf]
  %v54 = vunpack.c.l.b16 %v46
  %v55 = vunpack.c.l.b16 %v47
  %v56 = vunpack.c.l.b16 %v48
  %v57 = vunpack.c.l.b16 %v49
  %v58 = vpack.c.b16 %v55, %v54
  %v59 = vpack.c.b16 %v57, %v56
  %vm62 = vcmask 261120
  %v64 = vsel %vm62, %v43, 0
  %66 = vmatprep.subr.bf16.mxu0 0
  %67 = vmatpush1.bf16.msra.mxu0 0
  %68 = vmatprep.subr.bf16.mxu0 0
  %69 = vmatpush1.bf16.msra.mxu0 0
  %70 = vmatprep.subr.bf16.mxu0 0
  %71 = vmatpush1.bf16.msra.mxu0 0
  %72 = vmatprep.subr.bf16.mxu0 0
  %73 = vmatpush1.bf16.msra.mxu0 0
  %74 = vmatprep.subr.bf16.mxu0 0
  %75 = vmatpush1.bf16.msra.mxu0 0
  %76 = vmatprep.subr.bf16.mxu0 0
  %77 = vmatpush1.bf16.msra.mxu0 0
  %78 = vmatprep.subr.bf16.mxu0 0
  %79 = vmatpush1.bf16.msra.mxu0 %v59
  %80 = vmatprep.subr.bf16.mxu0 0
  %81 = vmatpush1.bf16.msra.mxu0 %v58
  %82 = vmatprep.subr.bf16.mxu0 0
  %83 = vmatpush2.bf16.msra.mxu0 0
  %84 = vmatprep.subr.bf16.mxu0 0
  %85 = vmatpush2.bf16.msra.mxu0 0
  %86 = vmatprep.subr.bf16.mxu0 0
  %87 = vmatpush2.bf16.msra.mxu0 0
  %88 = vmatprep.subr.bf16.mxu0 0
  %89 = vmatpush2.bf16.msra.mxu0 0
  %90 = vmatprep.subr.bf16.mxu0 0
  %91 = vmatpush2.bf16.msra.mxu0 0
  %92 = vmatprep.subr.bf16.mxu0 0
  %93 = vmatpush2.bf16.msra.mxu0 0
  %94 = vmatprep.subr.bf16.mxu0 0
  %95 = vmatpush2.bf16.msra.mxu0 0
  %96 = vmatprep.subr.bf16.mxu0 0
  %97 = vmatpush2.bf16.msra.mxu0 0
  %98 = vmatprep.mubr.bf16.mxu0 0
  %99 = vmatmul.mubr.bf16.gmra.mxu0 %v64
  %v100 = vpop.f32.mrf.mxu0
  %v101 = vadd.f32 0.0, %v100
  %v102 = vpop.f32.mrf.mxu0
  %v103 = vpop.f32.mrf.mxu0
  %v104 = vadd.f32 0.0, %v103
  %v105 = vpop.f32.mrf.mxu0
  %106 = vdwg.mxu0
  %v107 = vadd.f32 %v44, %v101
  %v108 = vadd.f32 %v45, %v104
  %109 = vst.msk [vmem:[#allocation2] sm:$0xff] %vm62, %v107
  %110 = vst.msk [vmem:[#allocation2 + $0x8] sm:$0xff] %vm62, %v108
  %v111 = vld [vmem:[#allocation3] sm:$0xff]
  %v112 = vld [vmem:[#allocation3 + $0x8] sm:$0xff]
  %v113 = vld [vmem:[%s2] sm:$0xf]
  %v114 = vld [vmem:[%s2 + $0x4] sm:$0xf]
  %v115 = vld [vmem:[%s2 + $0x8] sm:$0xf]
  %v116 = vld [vmem:[%s2 + $0xc] sm:$0xf]
  %v121 = vunpack.c.l.b16 %v113
  %v122 = vunpack.c.l.b16 %v114
  %v123 = vunpack.c.l.b16 %v115
  %v124 = vunpack.c.l.b16 %v116
  %v125 = vpack.c.b16 %v122, %v121
  %v126 = vpack.c.b16 %v124, %v123
  %129 = vmatprep.subr.bf16.mxu0 0
  %130 = vmatpush1.bf16.msra.mxu0 0
  %131 = vmatprep.subr.bf16.mxu0 0
  %132 = vmatpush1.bf16.msra.mxu0 0
  %133 = vmatprep.subr.bf16.mxu0 0
  %134 = vmatpush1.bf16.msra.mxu0 0
  %135 = vmatprep.subr.bf16.mxu0 0
  %136 = vmatpush1.bf16.msra.mxu0 0
  %137 = vmatprep.subr.bf16.mxu0 0
  %138 = vmatpush1.bf16.msra.mxu0 0
  %139 = vmatprep.subr.bf16.mxu0 0
  %140 = vmatpush1.bf16.msra.mxu0 0
  %141 = vmatprep.subr.bf16.mxu0 0
  %142 = vmatpush1.bf16.msra.mxu0 %v126
  %143 = vmatprep.subr.bf16.mxu0 0
  %144 = vmatpush1.bf16.msra.mxu0 %v125
  %145 = vmatprep.subr.bf16.mxu0 0
  %146 = vmatpush2.bf16.msra.mxu0 0
  %147 = vmatprep.subr.bf16.mxu0 0
  %148 = vmatpush2.bf16.msra.mxu0 0
  %149 = vmatprep.subr.bf16.mxu0 0
  %150 = vmatpush2.bf16.msra.mxu0 0
  %151 = vmatprep.subr.bf16.mxu0 0
  %152 = vmatpush2.bf16.msra.mxu0 0
  %153 = vmatprep.subr.bf16.mxu0 0
  %154 = vmatpush2.bf16.msra.mxu0 0
  %155 = vmatprep.subr.bf16.mxu0 0
  %156 = vmatpush2.bf16.msra.mxu0 0
  %157 = vmatprep.subr.bf16.mxu0 0
  %158 = vmatpush2.bf16.msra.mxu0 0
  %159 = vmatprep.subr.bf16.mxu0 0
  %160 = vmatpush2.bf16.msra.mxu0 0
  %161 = vmatprep.mubr.bf16.mxu0 0
  %162 = vmatmul.mubr.bf16.gmra.mxu0 %v64
  %v163 = vpop.f32.mrf.mxu0
  %v164 = vadd.f32 0.0, %v163
  %v165 = vpop.f32.mrf.mxu0
  %v166 = vpop.f32.mrf.mxu0
  %v167 = vadd.f32 0.0, %v166
  %v168 = vpop.f32.mrf.mxu0
  %169 = vdwg.mxu0
  %v170 = vadd.f32 %v111, %v164
  %v171 = vadd.f32 %v112, %v167
  %172 = vst.msk [vmem:[#allocation3] sm:$0xff] %vm62, %v170
  %173 = vst.msk [vmem:[#allocation3 + $0x8] sm:$0xff] %vm62, %v171
  %v174 = vld [vmem:[#allocation4] sm:$0xff]
  %v175 = vld [vmem:[#allocation4 + $0x8] sm:$0xff]
  %v176 = vld [vmem:[%s3] sm:$0xf]
  %v177 = vld [vmem:[%s3 + $0x4] sm:$0xf]
  %v178 = vld [vmem:[%s3 + $0x8] sm:$0xf]
  %v179 = vld [vmem:[%s3 + $0xc] sm:$0xf]
  %v184 = vunpack.c.l.b16 %v176
  %v185 = vunpack.c.l.b16 %v177
  %v186 = vunpack.c.l.b16 %v178
  %v187 = vunpack.c.l.b16 %v179
  %v188 = vpack.c.b16 %v185, %v184
  %v189 = vpack.c.b16 %v187, %v186
  %192 = vmatprep.subr.bf16.mxu0 0
  %193 = vmatpush1.bf16.msra.mxu0 0
  %194 = vmatprep.subr.bf16.mxu0 0
  %195 = vmatpush1.bf16.msra.mxu0 0
  %196 = vmatprep.subr.bf16.mxu0 0
  %197 = vmatpush1.bf16.msra.mxu0 0
  %198 = vmatprep.subr.bf16.mxu0 0
  %199 = vmatpush1.bf16.msra.mxu0 0
  %200 = vmatprep.subr.bf16.mxu0 0
  %201 = vmatpush1.bf16.msra.mxu0 0
  %202 = vmatprep.subr.bf16.mxu0 0
  %203 = vmatpush1.bf16.msra.mxu0 0
  %204 = vmatprep.subr.bf16.mxu0 0
  %205 = vmatpush1.bf16.msra.mxu0 %v189
  %206 = vmatprep.subr.bf16.mxu0 0
  %207 = vmatpush1.bf16.msra.mxu0 %v188
  %208 = vmatprep.subr.bf16.mxu0 0
  %209 = vmatpush2.bf16.msra.mxu0 0
  %210 = vmatprep.subr.bf16.mxu0 0
  %211 = vmatpush2.bf16.msra.mxu0 0
  %212 = vmatprep.subr.bf16.mxu0 0
  %213 = vmatpush2.bf16.msra.mxu0 0
  %214 = vmatprep.subr.bf16.mxu0 0
  %215 = vmatpush2.bf16.msra.mxu0 0
  %216 = vmatprep.subr.bf16.mxu0 0
  %217 = vmatpush2.bf16.msra.mxu0 0
  %218 = vmatprep.subr.bf16.mxu0 0
  %219 = vmatpush2.bf16.msra.mxu0 0
  %220 = vmatprep.subr.bf16.mxu0 0
  %221 = vmatpush2.bf16.msra.mxu0 0
  %222 = vmatprep.subr.bf16.mxu0 0
  %223 = vmatpush2.bf16.msra.mxu0 0
  %224 = vmatprep.mubr.bf16.mxu0 0
  %225 = vmatmul.mubr.bf16.gmra.mxu0 %v64
  %v226 = vpop.f32.mrf.mxu0
  %v227 = vadd.f32 0.0, %v226
  %v228 = vpop.f32.mrf.mxu0
  %v229 = vpop.f32.mrf.mxu0
  %v230 = vadd.f32 0.0, %v229
  %v231 = vpop.f32.mrf.mxu0
  %232 = vdwg.mxu0
  %v233 = vadd.f32 %v174, %v227
  %v234 = vadd.f32 %v175, %v230
  %235 = vst.msk [vmem:[#allocation4] sm:$0xff] %vm62, %v233
  %236 = vst.msk [vmem:[#allocation4 + $0x8] sm:$0xff] %vm62, %v234
  // Predicated region
  $region34: #{multi_head_attention.3} parent=0 // pred_check
    %p237 = pneg %p30
  $region35: #{multi_head_attention.3} parent=0 // pred_check_branch
    %239 = sbr.rel (%p237) target = $region37
  $region36: #{multi_head_attention.3} parent=0 // pred_region
    %v240 = vld [vmem:[#allocation2] sm:$0xff]
    %v241 = vld [vmem:[#allocation2 + $0x8] sm:$0xff]
    %v242 = vld [vmem:[%s4] sm:$0x1]
    %v244 = vlaneseq
    %v245 = vshrl.u32 %v244, 7
    %v246 = vsub.s32 0, %v245
    %v247 = vrot.slane %v242, %v246
    %v249 = vadd.f32 %v240, %v247
    %v250 = vadd.f32 %v241, %v247
    %v251 = vmul.f32 %v249, 0.35355338
    %v252 = vmul.f32 %v250, 0.35355338
    %v253 = vpack.c.bf16 %v252, %v251
    %v255 = vunpack.c.l.b16 %v253
    %v256 = vunpack.c.h.b16 %v253
    %v257 = vpack.c.b16 %v255, %v255
    %v258 = vpack.c.b16 %v256, %v256
    %vm261 = vcmask 257024
    %262 = vst.msk [vmem:[%s7] sm:$0xf] %vm261, %v257
    %263 = vst.msk [vmem:[%s7 + $0x4] sm:$0xf] %vm261, %v258
    %v264 = vld [vmem:[#allocation3] sm:$0xff]
    %v265 = vld [vmem:[#allocation3 + $0x8] sm:$0xff]
    %v266 = vld [vmem:[%s5] sm:$0x1]
    %v268 = vlaneseq
    %v269 = vshrl.u32 %v268, 7
    %v270 = vsub.s32 0, %v269
    %v271 = vrot.slane %v266, %v270
    %v273 = vadd.f32 %v264, %v271
    %v274 = vadd.f32 %v265, %v271
    %v275 = vpack.c.bf16 %v274, %v273
    %v277 = vunpack.c.l.b16 %v275
    %v278 = vunpack.c.h.b16 %v275
    %v279 = vpack.c.b16 %v277, %v277
    %v280 = vpack.c.b16 %v278, %v278
    %283 = vst.msk [vmem:[%s8] sm:$0xf] %vm261, %v279
    %284 = vst.msk [vmem:[%s8 + $0x4] sm:$0xf] %vm261, %v280
    %v285 = vld [vmem:[#allocation4] sm:$0xff]
    %v286 = vld [vmem:[#allocation4 + $0x8] sm:$0xff]
    %v287 = vld [vmem:[%s6] sm:$0x1]
    %v289 = vlaneseq
    %v290 = vshrl.u32 %v289, 7
    %v291 = vsub.s32 0, %v290
    %v292 = vrot.slane %v287, %v291
    %v294 = vadd.f32 %v285, %v292
    %v295 = vadd.f32 %v286, %v292
    %v296 = vpack.c.bf16 %v295, %v294
    %v298 = vunpack.c.l.b16 %v296
    %v299 = vunpack.c.h.b16 %v296
    %v300 = vpack.c.b16 %v298, %v298
    %v301 = vpack.c.b16 %v299, %v299
    %304 = vst.msk [vmem:[%s9] sm:$0xf] %vm261, %v300
    %305 = vst.msk [vmem:[%s9 + $0x4] sm:$0xf] %vm261, %v301
  $region37: #{multi_head_attention.3} parent=0 // pred_fallthru
    _
  // Predicated region
  $region38: #{multi_head_attention.3} parent=0 // pred_check
    _
  $region39: #{multi_head_attention.3} parent=0 // pred_check_branch
    %307 = sbr.rel (0) target = $region41
  $region40: #{multi_head_attention.3} parent=0 // pred_region
    _
  $region41: #{multi_head_attention.3} parent=0 // pred_fallthru
    _
  // Predicated region
  $region42: #{multi_head_attention.3} parent=0 // pred_check
    _
  $region43: #{multi_head_attention.3} parent=0 // pred_check_branch
    %309 = sbr.rel (0) target = $region45
  $region44: #{multi_head_attention.3} parent=0 // pred_region
    _
  $region45: #{multi_head_attention.3} parent=0 // pred_fallthru
    _
  // Predicated region
  $region46: #{multi_head_attention.3} parent=0 // pred_check
    _
  $region47: #{multi_head_attention.3} parent=0 // pred_check_branch
    %311 = sbr.rel (0) target = $region49
  $region48: #{multi_head_attention.3} parent=0 // pred_region
    _
  $region49: #{multi_head_attention.3} parent=0 // pred_fallthru
    _
  // Predicated region
  $region50: #{multi_head_attention.3} parent=0 // pred_check
    _
  $region51: #{multi_head_attention.3} parent=0 // pred_check_branch
    %313 = sbr.rel (0) target = $region53
  $region52: #{multi_head_attention.3} parent=0 // pred_region
    _
  $region53: #{multi_head_attention.3} parent=0 // pred_fallthru
    _
  // Predicated region
  $region54: #{multi_head_attention.3} parent=0 // pred_check
    _
  $region55: #{multi_head_attention.3} parent=0 // pred_check_branch
    %315 = sbr.rel (0) target = $region57
  $region56: #{multi_head_attention.3} parent=0 // pred_region
    _
  $region57: #{multi_head_attention.3} parent=0 // pred_fallthru
    _
  // Predicated region
  $region58: #{multi_head_attention.3} parent=0 // pred_check
    _
  $region59: #{multi_head_attention.3} parent=0 // pred_check_branch
    %317 = sbr.rel (0) target = $region61
  $region60: #{multi_head_attention.3} parent=0 // pred_region
    _
  $region61: #{multi_head_attention.3} parent=0 // pred_fallthru
    _

// kernel: multi_head_attention.4
$region0: #{multi_head_attention.4}
  #allocation0 [shape = 'u32[]', space=smem, size = 0x4, offset = 0x4, fixed_abs, tag = 'smem constant byte address 0x4 - core index']
  #allocation1 [shape = 'u32[144,128]{1,0:T(1,128)}', space=vmem, size = 0x12000, scoped, tag = 'internal scratch']
  %s0 = inlined_call_operand.vmem [shape: bf16[8,8,8], index: 0, kind: input, shape index: {}]
  %s1 = inlined_call_operand.vmem [shape: bf16[8,8,8], index: 1, kind: input, shape index: {}]
  %s2 = inlined_call_operand.vmem [shape: bf16[8,8,8], index: 2, kind: input, shape index: {}]
  %s3 = inlined_call_operand.vmem [shape: bf16[8,8,8], index: 3, kind: output, shape index: {}]
  %s4 = sld [smem:[#allocation0]]
  $region45: #{multi_head_attention.4} parent=0
    _
  %s6 = ssub.s32 1, %s4
  %s7 = scalar_select 0, %s6, %s4
  loop: start=0, step=1, limit=4
  $region2: #{multi_head_attention.4} parent=0 // loop_pre_header
    _
  $region3: #{multi_head_attention.4} parent=0 // loop_header
    %s9 = sphi 0, %s13
    %p10 = scmp.ge.s32.totalorder %s9, 4
    %s19 = sphi 0, %s21
    %s22 = sphi 0, %s19
    %s23 = sphi 0, %s22
    %s39 = sphi 0, %s23
    %s45 = sphi 0, %s47
    %s48 = sphi 0, %s45
    %s49 = sphi 0, %s48
    %s65 = sphi 0, %s49
    %s71 = sphi 0, %s73
    %s74 = sphi 0, %s71
    %s75 = sphi 0, %s74
    %s91 = sphi 0, %s75
    %s97 = sphi 0, %s99
    %s100 = sphi 0, %s97
    %s101 = sphi 0, %s100
    %s117 = sphi 0, %s101
  $region4: #{multi_head_attention.4} parent=0 // loop_header_branch
    %12 = sbr.rel (%p10) target = $region8
  $region5: #{multi_head_attention.4} parent=0 // loop_body
    %s14 = ssub.s32 %s9, 1
    %s15 = ssub.s32 %s9, 2
    %s16 = sadd.s32 %s9, 1
    %s17 = ssub.s32 %s9, %s16
    %p18 = scmp.eq.s32.totalorder %s17, 0
    %s20 = sadd.s32 %s19, 1
    %s21 = scalar_select %p18, %s19, %s20
    %p24 = pneg %p18
    %p25 = scmp.eq.s32.totalorder %s9, 1
    %p26 = por %p24, %p25
    %p27 = scmp.ne.s32.totalorder %s19, %s22
    %p28 = scmp.eq.s32.totalorder %s9, 0
    %p29 = por %p27, %p28
    %p30 = scmp.ne.s32.totalorder %s19, %s22
    %p31 = scmp.eq.s32.totalorder %s14, 1
    %p32 = por %p30, %p31
    %p33 = scmp.ne.s32.totalorder %s22, %s23
    %p34 = scmp.eq.s32.totalorder %s14, 0
    %p35 = por %p33, %p34
    %p36 = scmp.ne.s32.totalorder %s22, %s23
    %p37 = scmp.eq.s32.totalorder %s15, 1
    %p38 = por %p36, %p37
    %p40 = scmp.ne.s32.totalorder %s23, %s39
    %p41 = scmp.eq.s32.totalorder %s15, 0
    %p42 = por %p40, %p41
    %s43 = ssub.s32 %s9, %s16
    %p44 = scmp.eq.s32.totalorder %s43, 0
    %s46 = sadd.s32 %s45, 1
    %s47 = scalar_select %p44, %s45, %s46
    %p50 = pneg %p44
    %p51 = scmp.eq.s32.totalorder %s9, 1
    %p52 = por %p50, %p51
    %p53 = scmp.ne.s32.totalorder %s45, %s48
    %p54 = scmp.eq.s32.totalorder %s9, 0
    %p55 = por %p53, %p54
    %p56 = scmp.ne.s32.totalorder %s45, %s48
    %p57 = scmp.eq.s32.totalorder %s14, 1
    %p58 = por %p56, %p57
    %p59 = scmp.ne.s32.totalorder %s48, %s49
    %p60 = scmp.eq.s32.totalorder %s14, 0
    %p61 = por %p59, %p60
    %p62 = scmp.ne.s32.totalorder %s48, %s49
    %p63 = scmp.eq.s32.totalorder %s15, 1
    %p64 = por %p62, %p63
    %p66 = scmp.ne.s32.totalorder %s49, %s65
    %p67 = scmp.eq.s32.totalorder %s15, 0
    %p68 = por %p66, %p67
    %s69 = ssub.s32 %s9, %s16
    %p70 = scmp.eq.s32.totalorder %s69, 0
    %s72 = sadd.s32 %s71, 1
    %s73 = scalar_select %p70, %s71, %s72
    %p76 = pneg %p70
    %p77 = scmp.eq.s32.totalorder %s9, 1
    %p78 = por %p76, %p77
    %p79 = scmp.ne.s32.totalorder %s71, %s74
    %p80 = scmp.eq.s32.totalorder %s9, 0
    %p81 = por %p79, %p80
    %p82 = scmp.ne.s32.totalorder %s71, %s74
    %p83 = scmp.eq.s32.totalorder %s14, 1
    %p84 = por %p82, %p83
    %p85 = scmp.ne.s32.totalorder %s74, %s75
    %p86 = scmp.eq.s32.totalorder %s14, 0
    %p87 = por %p85, %p86
    %p88 = scmp.ne.s32.totalorder %s74, %s75
    %p89 = scmp.eq.s32.totalorder %s15, 1
    %p90 = por %p88, %p89
    %p92 = scmp.ne.s32.totalorder %s75, %s91
    %p93 = scmp.eq.s32.totalorder %s15, 0
    %p94 = por %p92, %p93
    %s95 = ssub.s32 %s9, %s16
    %p96 = scmp.eq.s32.totalorder %s95, 0
    %s98 = sadd.s32 %s97, 1
    %s99 = scalar_select %p96, %s97, %s98
    %p102 = pneg %p96
    %p103 = scmp.eq.s32.totalorder %s9, 1
    %p104 = por %p102, %p103
    %p105 = scmp.ne.s32.totalorder %s97, %s100
    %p106 = scmp.eq.s32.totalorder %s9, 0
    %p107 = por %p105, %p106
    %p108 = scmp.ne.s32.totalorder %s97, %s100
    %p109 = scmp.eq.s32.totalorder %s14, 1
    %p110 = por %p108, %p109
    %p111 = scmp.ne.s32.totalorder %s100, %s101
    %p112 = scmp.eq.s32.totalorder %s14, 0
    %p113 = por %p111, %p112
    %p114 = scmp.ne.s32.totalorder %s100, %s101
    %p115 = scmp.eq.s32.totalorder %s15, 1
    %p116 = por %p114, %p115
    %p118 = scmp.ne.s32.totalorder %s101, %s117
    %p119 = scmp.eq.s32.totalorder %s15, 0
    %p120 = por %p118, %p119
    %p121 = scmp.le.s32.totalorder 1, %s9
    %p122 = scmp.lt.s32.totalorder %s9, 3
    %p123 = pnand %p121, %p122
    %p124 = pneg %p123
    // Predicated region
    $region9: #{multi_head_attention.4} parent=5 // pred_check
      _
    $region10: #{multi_head_attention.4} parent=5 // pred_check_branch
      %126 = sbr.rel (%p123) target = $region12
    $region11: #{multi_head_attention.4} parent=5 // pred_region
      %s127 = ssub.s32 %s9, 1
    $region12: #{multi_head_attention.4} parent=5 // pred_fallthru
      _
    %p128 = scmp.lt.s32.totalorder %s9, 2
    // Predicated region
    $region13: #{multi_head_attention.4} parent=5 // pred_check
      %p129 = pneg %p128
    $region14: #{multi_head_attention.4} parent=5 // pred_check_branch
      %131 = sbr.rel (%p129) target = $region16
    $region15: #{multi_head_attention.4} parent=5 // pred_region
      // Predicated region
      $region17: #{multi_head_attention.4} parent=15 // pred_check
        %p132 = pneg %p29
      $region18: #{multi_head_attention.4} parent=15 // pred_check_branch
        %134 = sbr.rel (%p132) target = $region20
      $region19: #{multi_head_attention.4} parent=15 // pred_region
        %s135 = smul.u32 4, %s9
        %p136 = scmp.lt.s32.totalorder %s135, 7
        %s137 = scalar_select %p136, %s135, 7
        %s138 = smul.addr %s137, 4
        %s139 = scalar_lea.vmem %s0, %s138
        %s140 = smul.u32 4, %s9
      $region20: #{multi_head_attention.4} parent=15 // pred_fallthru
        _
      // Predicated region
      $region21: #{multi_head_attention.4} parent=15 // pred_check
        %p141 = pneg %p55
      $region22: #{multi_head_attention.4} parent=15 // pred_check_branch
        %143 = sbr.rel (%p141) target = $region24
      $region23: #{multi_head_attention.4} parent=15 // pred_region
        %s144 = smul.u32 4, %s9
        %p145 = scmp.lt.s32.totalorder %s144, 7
        %s146 = scalar_select %p145, %s144, 7
        %s147 = smul.addr %s146, 4
        %s148 = scalar_lea.vmem %s1, %s147
        %s149 = smul.u32 4, %s9
      $region24: #{multi_head_attention.4} parent=15 // pred_fallthru
        _
      // Predicated region
      $region25: #{multi_head_attention.4} parent=15 // pred_check
        %p150 = pneg %p81
      $region26: #{multi_head_attention.4} parent=15 // pred_check_branch
        %152 = sbr.rel (%p150) target = $region28
      $region27: #{multi_head_attention.4} parent=15 // pred_region
        %s153 = smul.u32 4, %s9
        %p154 = scmp.lt.s32.totalorder %s153, 7
        %s155 = scalar_select %p154, %s153, 7
        %s156 = smul.addr %s155, 4
        %s157 = scalar_lea.vmem %s2, %s156
        %s158 = smul.u32 4, %s9
      $region28: #{multi_head_attention.4} parent=15 // pred_fallthru
        _
    $region16: #{multi_head_attention.4} parent=5 // pred_fallthru
      _
    %p159 = scmp.le.s32.totalorder 1, %s9
    %p160 = scmp.lt.s32.totalorder %s9, 3
    %p161 = pnand %p159, %p160
    %p162 = pneg %p161
    // Predicated region
    $region29: #{multi_head_attention.4} parent=5 // pred_check
      _
    $region30: #{multi_head_attention.4} parent=5 // pred_check_branch
      %164 = sbr.rel (%p161) target = $region32
    $region31: #{multi_head_attention.4} parent=5 // pred_region
      %s165 = ssub.s32 %s9, 1
      %s166 = smul.u32 4, %s14
      %p167 = scmp.lt.s32.totalorder %s166, 7
      %s168 = scalar_select %p167, %s166, 7
      %s169 = smul.addr %s168, 4
      %s170 = scalar_lea.vmem %s0, %s169
      %p171 = pneg %p35
      %p172 = pneg %p32
      %s173 = smul.u32 4, %s14
      %p174 = scmp.lt.s32.totalorder %s173, 7
      %s175 = scalar_select %p174, %s173, 7
      %s176 = smul.addr %s175, 4
      %s177 = scalar_lea.vmem %s1, %s176
      %p178 = pneg %p61
      %p179 = pneg %p58
      %s180 = smul.u32 4, %s14
      %p181 = scmp.lt.s32.totalorder %s180, 7
      %s182 = scalar_select %p181, %s180, 7
      %s183 = smul.addr %s182, 4
      %s184 = scalar_lea.vmem %s2, %s183
      %p185 = pneg %p87
      %p186 = pneg %p84
      %p187 = pneg %p113
      %p188 = pneg %p110
      %s189 = smul.u32 4, %s14
      %p190 = scmp.lt.s32.totalorder %s189, 7
      %s191 = scalar_select %p190, %s189, 7
      %s192 = smul.addr %s191, 4
      %s193 = scalar_lea.vmem %s3, %s192
      %s194 = smul.u32 4, %s14
      %p195 = scmp.lt.s32.totalorder %s194, 7
      %s196 = scalar_select %p195, %s194, 7
      %s197 = smul.addr %s196, 4
      %s198 = scalar_lea.vmem %s0, %s197
      %s199 = smul.u32 4, %s14
      %s200 = smul.u32 4, %s14
      %p201 = scmp.lt.s32.totalorder %s200, 7
      %s202 = scalar_select %p201, %s200, 7
      %s203 = smul.addr %s202, 4
      %s204 = scalar_lea.vmem %s1, %s203
      %s205 = smul.u32 4, %s14
      %s206 = smul.u32 4, %s14
      %p207 = scmp.lt.s32.totalorder %s206, 7
      %s208 = scalar_select %p207, %s206, 7
      %s209 = smul.addr %s208, 4
      %s210 = scalar_lea.vmem %s2, %s209
      %s211 = smul.u32 4, %s14
      %s212 = smul.u32 4, %s14
      %p213 = scmp.lt.s32.totalorder %s212, 7
      %s214 = scalar_select %p213, %s212, 7
      %s215 = smul.addr %s214, 4
      %s216 = scalar_lea.vmem %s3, %s215
      %s217 = smul.u32 4, %s14
      %v219 = vld [vmem:[%s198] sm:$0xf]
      %v220 = vld [vmem:[%s198 + $0x4] sm:$0xf]
      %v221 = vld [vmem:[%s198 + $0x8] sm:$0xf]
      %v222 = vld [vmem:[%s198 + $0xc] sm:$0xf]
      %v223 = vld [vmem:[%s204] sm:$0xf]
      %v224 = vld [vmem:[%s204 + $0x4] sm:$0xf]
      %v225 = vld [vmem:[%s204 + $0x8] sm:$0xf]
      %v226 = vld [vmem:[%s204 + $0xc] sm:$0xf]
      %vm227 = vcmask 64512
      %v229 = vsel %vm227, %v219, 0
      %v232 = vsel %vm227, %v223, 0
      %234 = vmatprep.subr.bf16.mxu0 0
      %235 = vmatpush1.bf16.xpose.msra.mxu0 0
      %236 = vmatprep.subr.bf16.mxu0 0
      %237 = vmatpush1.bf16.xpose.msra.mxu0 0
      %238 = vmatprep.subr.bf16.mxu0 0
      %239 = vmatpush1.bf16.xpose.msra.mxu0 0
      %240 = vmatprep.subr.bf16.mxu0 0
      %241 = vmatpush1.bf16.xpose.msra.mxu0 0
      %242 = vmatprep.subr.bf16.mxu0 0
      %243 = vmatpush1.bf16.xpose.msra.mxu0 0
      %244 = vmatprep.subr.bf16.mxu0 0
      %245 = vmatpush1.bf16.xpose.msra.mxu0 0
      %246 = vmatprep.subr.bf16.mxu0 0
      %247 = vmatpush1.bf16.xpose.msra.mxu0 0
      %248 = vmatprep.subr.bf16.mxu0 0
      %249 = vmatpush1.bf16.xpose.msra.mxu0 %v232
      %250 = vmatprep.subr.bf16.mxu0 0
      %251 = vmatpush2.bf16.xpose.msra.mxu0 0
      %252 = vmatprep.subr.bf16.mxu0 0
      %253 = vmatpush2.bf16.xpose.msra.mxu0 0
      %254 = vmatprep.subr.bf16.mxu0 0
      %255 = vmatpush2.bf16.xpose.msra.mxu0 0
      %256 = vmatprep.subr.bf16.mxu0 0
      %257 = vmatpush2.bf16.xpose.msra.mxu0 0
      %258 = vmatprep.subr.bf16.mxu0 0
      %259 = vmatpush2.bf16.xpose.msra.mxu0 0
      %260 = vmatprep.subr.bf16.mxu0 0
      %261 = vmatpush2.bf16.xpose.msra.mxu0 0
      %262 = vmatprep.subr.bf16.mxu0 0
      %263 = vmatpush2.bf16.xpose.msra.mxu0 0
      %264 = vmatprep.subr.bf16.mxu0 0
      %265 = vmatpush2.bf16.xpose.msra.mxu0 0
      %266 = vmatprep.mubr.bf16.mxu0 0
      %267 = vmatmul.mubr.bf16.gmra.mxu0 %v229
      %v268 = vpop.f32.mrf.mxu0
      %v269 = vadd.f32 0.0, %v268
      %v270 = vpop.f32.mrf.mxu0
      %v271 = vpop.f32.mrf.mxu0
      %v272 = vpop.f32.mrf.mxu0
      %273 = vdwg.mxu0
      %v275 = vsel %vm227, %v220, 0
      %v278 = vsel %vm227, %v224, 0
      %280 = vmatprep.subr.bf16.mxu0 0
      %281 = vmatpush1.bf16.xpose.msra.mxu0 0
      %282 = vmatprep.subr.bf16.mxu0 0
      %283 = vmatpush1.bf16.xpose.msra.mxu0 0
      %284 = vmatprep.subr.bf16.mxu0 0
      %285 = vmatpush1.bf16.xpose.msra.mxu0 0
      %286 = vmatprep.subr.bf16.mxu0 0
      %287 = vmatpush1.bf16.xpose.msra.mxu0 0
      %288 = vmatprep.subr.bf16.mxu0 0
      %289 = vmatpush1.bf16.xpose.msra.mxu0 0
      %290 = vmatprep.subr.bf16.mxu0 0
      %291 = vmatpush1.bf16.xpose.msra.mxu0 0
      %292 = vmatprep.subr.bf16.mxu0 0
      %293 = vmatpush1.bf16.xpose.msra.mxu0 0
      %294 = vmatprep.subr.bf16.mxu0 0
      %295 = vmatpush1.bf16.xpose.msra.mxu0 %v278
      %296 = vmatprep.subr.bf16.mxu0 0
      %297 = vmatpush2.bf16.xpose.msra.mxu0 0
      %298 = vmatprep.subr.bf16.mxu0 0
      %299 = vmatpush2.bf16.xpose.msra.mxu0 0
      %300 = vmatprep.subr.bf16.mxu0 0
      %301 = vmatpush2.bf16.xpose.msra.mxu0 0
      %302 = vmatprep.subr.bf16.mxu0 0
      %303 = vmatpush2.bf16.xpose.msra.mxu0 0
      %304 = vmatprep.subr.bf16.mxu0 0
      %305 = vmatpush2.bf16.xpose.msra.mxu0 0
      %306 = vmatprep.subr.bf16.mxu0 0
      %307 = vmatpush2.bf16.xpose.msra.mxu0 0
      %308 = vmatprep.subr.bf16.mxu0 0
      %309 = vmatpush2.bf16.xpose.msra.mxu0 0
      %310 = vmatprep.subr.bf16.mxu0 0
      %311 = vmatpush2.bf16.xpose.msra.mxu0 0
      %312 = vmatprep.mubr.bf16.mxu0 0
      %313 = vmatmul.mubr.bf16.gmra.mxu0 %v275
      %v314 = vpop.f32.mrf.mxu0
      %v315 = vadd.f32 0.0, %v314
      %v316 = vpop.f32.mrf.mxu0
      %v317 = vpop.f32.mrf.mxu0
      %v318 = vpop.f32.mrf.mxu0
      %319 = vdwg.mxu0
      %v321 = vsel %vm227, %v221, 0
      %v324 = vsel %vm227, %v225, 0
      %326 = vmatprep.subr.bf16.mxu0 0
      %327 = vmatpush1.bf16.xpose.msra.mxu0 0
      %328 = vmatprep.subr.bf16.mxu0 0
      %329 = vmatpush1.bf16.xpose.msra.mxu0 0
      %330 = vmatprep.subr.bf16.mxu0 0
      %331 = vmatpush1.bf16.xpose.msra.mxu0 0
      %332 = vmatprep.subr.bf16.mxu0 0
      %333 = vmatpush1.bf16.xpose.msra.mxu0 0
      %334 = vmatprep.subr.bf16.mxu0 0
      %335 = vmatpush1.bf16.xpose.msra.mxu0 0
      %336 = vmatprep.subr.bf16.mxu0 0
      %337 = vmatpush1.bf16.xpose.msra.mxu0 0
      %338 = vmatprep.subr.bf16.mxu0 0
      %339 = vmatpush1.bf16.xpose.msra.mxu0 0
      %340 = vmatprep.subr.bf16.mxu0 0
      %341 = vmatpush1.bf16.xpose.msra.mxu0 %v324
      %342 = vmatprep.subr.bf16.mxu0 0
      %343 = vmatpush2.bf16.xpose.msra.mxu0 0
      %344 = vmatprep.subr.bf16.mxu0 0
      %345 = vmatpush2.bf16.xpose.msra.mxu0 0
      %346 = vmatprep.subr.bf16.mxu0 0
      %347 = vmatpush2.bf16.xpose.msra.mxu0 0
      %348 = vmatprep.subr.bf16.mxu0 0
      %349 = vmatpush2.bf16.xpose.msra.mxu0 0
      %350 = vmatprep.subr.bf16.mxu0 0
      %351 = vmatpush2.bf16.xpose.msra.mxu0 0
      %352 = vmatprep.subr.bf16.mxu0 0
      %353 = vmatpush2.bf16.xpose.msra.mxu0 0
      %354 = vmatprep.subr.bf16.mxu0 0
      %355 = vmatpush2.bf16.xpose.msra.mxu0 0
      %356 = vmatprep.subr.bf16.mxu0 0
      %357 = vmatpush2.bf16.xpose.msra.mxu0 0
      %358 = vmatprep.mubr.bf16.mxu0 0
      %359 = vmatmul.mubr.bf16.gmra.mxu0 %v321
      %v360 = vpop.f32.mrf.mxu0
      %v361 = vadd.f32 0.0, %v360
      %v362 = vpop.f32.mrf.mxu0
      %v363 = vpop.f32.mrf.mxu0
      %v364 = vpop.f32.mrf.mxu0
      %365 = vdwg.mxu0
      %v367 = vsel %vm227, %v222, 0
      %v370 = vsel %vm227, %v226, 0
      %372 = vmatprep.subr.bf16.mxu0 0
      %373 = vmatpush1.bf16.xpose.msra.mxu0 0
      %374 = vmatprep.subr.bf16.mxu0 0
      %375 = vmatpush1.bf16.xpose.msra.mxu0 0
      %376 = vmatprep.subr.bf16.mxu0 0
      %377 = vmatpush1.bf16.xpose.msra.mxu0 0
      %378 = vmatprep.subr.bf16.mxu0 0
      %379 = vmatpush1.bf16.xpose.msra.mxu0 0
      %380 = vmatprep.subr.bf16.mxu0 0
      %381 = vmatpush1.bf16.xpose.msra.mxu0 0
      %382 = vmatprep.subr.bf16.mxu0 0
      %383 = vmatpush1.bf16.xpose.msra.mxu0 0
      %384 = vmatprep.subr.bf16.mxu0 0
      %385 = vmatpush1.bf16.xpose.msra.mxu0 0
      %386 = vmatprep.subr.bf16.mxu0 0
      %387 = vmatpush1.bf16.xpose.msra.mxu0 %v370
      %388 = vmatprep.subr.bf16.mxu0 0
      %389 = vmatpush2.bf16.xpose.msra.mxu0 0
      %390 = vmatprep.subr.bf16.mxu0 0
      %391 = vmatpush2.bf16.xpose.msra.mxu0 0
      %392 = vmatprep.subr.bf16.mxu0 0
      %393 = vmatpush2.bf16.xpose.msra.mxu0 0
      %394 = vmatprep.subr.bf16.mxu0 0
      %395 = vmatpush2.bf16.xpose.msra.mxu0 0
      %396 = vmatprep.subr.bf16.mxu0 0
      %397 = vmatpush2.bf16.xpose.msra.mxu0 0
      %398 = vmatprep.subr.bf16.mxu0 0
      %399 = vmatpush2.bf16.xpose.msra.mxu0 0
      %400 = vmatprep.subr.bf16.mxu0 0
      %401 = vmatpush2.bf16.xpose.msra.mxu0 0
      %402 = vmatprep.subr.bf16.mxu0 0
      %403 = vmatpush2.bf16.xpose.msra.mxu0 0
      %404 = vmatprep.mubr.bf16.mxu0 0
      %405 = vmatmul.mubr.bf16.gmra.mxu0 %v367
      %v406 = vpop.f32.mrf.mxu0
      %v407 = vadd.f32 0.0, %v406
      %v408 = vpop.f32.mrf.mxu0
      %v409 = vpop.f32.mrf.mxu0
      %v410 = vpop.f32.mrf.mxu0
      %411 = vdwg.mxu0
      %v412 = vsel %vm227, %v269, -inf
      %413 = vmax.xlane.f32.xlu0 %v412
      %v414 = vpop.xlane.xlu0 %413
      %v415 = vsel %vm227, %v315, -inf
      %416 = vmax.xlane.f32.xlu0 %v415
      %v417 = vpop.xlane.xlu0 %416
      %v418 = vsel %vm227, %v361, -inf
      %419 = vmax.xlane.f32.xlu0 %v418
      %v420 = vpop.xlane.xlu0 %419
      %v421 = vsel %vm227, %v407, -inf
      %422 = vmax.xlane.f32.xlu0 %v421
      %v423 = vpop.xlane.xlu0 %422
      %v424 = vsub.f32 %v269, %v414
      %v425 = vsub.f32 %v315, %v417
      %v426 = vsub.f32 %v361, %v420
      %v427 = vsub.f32 %v407, %v423
      %v428 = vmul.f32 %v424, 1.442695
      %v429 = vpow.pop %v428
      %v430 = vmul.f32 %v425, 1.442695
      %v431 = vpow.pop %v430
      %v432 = vmul.f32 %v426, 1.442695
      %v433 = vpow.pop %v432
      %v434 = vmul.f32 %v427, 1.442695
      %v435 = vpow.pop %v434
      %v436 = vsel %vm227, %v429, 0.0
      %437 = vadd.xlane.f32.xlu0 %v436
      %v438 = vpop.xlane.xlu0 %437
      %v439 = vsel %vm227, %v431, 0.0
      %440 = vadd.xlane.f32.xlu0 %v439
      %v441 = vpop.xlane.xlu0 %440
      %v442 = vsel %vm227, %v433, 0.0
      %443 = vadd.xlane.f32.xlu0 %v442
      %v444 = vpop.xlane.xlu0 %443
      %v445 = vsel %vm227, %v435, 0.0
      %446 = vadd.xlane.f32.xlu0 %v445
      %v447 = vpop.xlane.xlu0 %446
      %v448 = vrcp.pop %v438
      %v449 = vrcp.pop %v441
      %v450 = vrcp.pop %v444
      %v451 = vrcp.pop %v447
      %v452 = vmul.f32 %v429, %v448
      %v453 = vmul.f32 %v431, %v449
      %v454 = vmul.f32 %v433, %v450
      %v455 = vmul.f32 %v435, %v451
      %v456 = vpack.c.bf16 %v452, %v452
      %v457 = vpack.c.bf16 %v453, %v453
      %v458 = vpack.c.bf16 %v454, %v454
      %v459 = vpack.c.bf16 %v455, %v455
      %v460 = vld [vmem:[%s210] sm:$0xf]
      %v461 = vld [vmem:[%s210 + $0x4] sm:$0xf]
      %v462 = vld [vmem:[%s210 + $0x8] sm:$0xf]
      %v463 = vld [vmem:[%s210 + $0xc] sm:$0xf]
      %v465 = vsel %vm227, %v456, 0
      %vm467 = vcmask 1043456
      %v469 = vsel %vm467, %v460, 0
      %471 = vmatprep.subr.bf16.mxu0 0
      %472 = vmatpush1.bf16.msra.mxu0 0
      %473 = vmatprep.subr.bf16.mxu0 0
      %474 = vmatpush1.bf16.msra.mxu0 0
      %475 = vmatprep.subr.bf16.mxu0 0
      %476 = vmatpush1.bf16.msra.mxu0 0
      %477 = vmatprep.subr.bf16.mxu0 0
      %478 = vmatpush1.bf16.msra.mxu0 0
      %479 = vmatprep.subr.bf16.mxu0 0
      %480 = vmatpush1.bf16.msra.mxu0 0
      %481 = vmatprep.subr.bf16.mxu0 0
      %482 = vmatpush1.bf16.msra.mxu0 0
      %483 = vmatprep.subr.bf16.mxu0 0
      %484 = vmatpush1.bf16.msra.mxu0 0
      %485 = vmatprep.subr.bf16.mxu0 0
      %486 = vmatpush1.bf16.msra.mxu0 %v469
      %487 = vmatprep.subr.bf16.mxu0 0
      %488 = vmatpush2.bf16.msra.mxu0 0
      %489 = vmatprep.subr.bf16.mxu0 0
      %490 = vmatpush2.bf16.msra.mxu0 0
      %491 = vmatprep.subr.bf16.mxu0 0
      %492 = vmatpush2.bf16.msra.mxu0 0
      %493 = vmatprep.subr.bf16.mxu0 0
      %494 = vmatpush2.bf16.msra.mxu0 0
      %495 = vmatprep.subr.bf16.mxu0 0
      %496 = vmatpush2.bf16.msra.mxu0 0
      %497 = vmatprep.subr.bf16.mxu0 0
      %498 = vmatpush2.bf16.msra.mxu0 0
      %499 = vmatprep.subr.bf16.mxu0 0
      %500 = vmatpush2.bf16.msra.mxu0 0
      %501 = vmatprep.subr.bf16.mxu0 0
      %502 = vmatpush2.bf16.msra.mxu0 0
      %503 = vmatprep.mubr.bf16.mxu0 0
      %504 = vmatmul.mubr.bf16.gmra.mxu0 %v465
      %v505 = vpop.f32.mrf.mxu0
      %v506 = vadd.f32 0.0, %v505
      %v507 = vpop.f32.mrf.mxu0
      %v508 = vpop.f32.mrf.mxu0
      %v509 = vpop.f32.mrf.mxu0
      %510 = vdwg.mxu0
      %v512 = vsel %vm227, %v457, 0
      %v515 = vsel %vm467, %v461, 0
      %517 = vmatprep.subr.bf16.mxu0 0
      %518 = vmatpush1.bf16.msra.mxu0 0
      %519 = vmatprep.subr.bf16.mxu0 0
      %520 = vmatpush1.bf16.msra.mxu0 0
      %521 = vmatprep.subr.bf16.mxu0 0
      %522 = vmatpush1.bf16.msra.mxu0 0
      %523 = vmatprep.subr.bf16.mxu0 0
      %524 = vmatpush1.bf16.msra.mxu0 0
      %525 = vmatprep.subr.bf16.mxu0 0
      %526 = vmatpush1.bf16.msra.mxu0 0
      %527 = vmatprep.subr.bf16.mxu0 0
      %528 = vmatpush1.bf16.msra.mxu0 0
      %529 = vmatprep.subr.bf16.mxu0 0
      %530 = vmatpush1.bf16.msra.mxu0 0
      %531 = vmatprep.subr.bf16.mxu0 0
      %532 = vmatpush1.bf16.msra.mxu0 %v515
      %533 = vmatprep.subr.bf16.mxu0 0
      %534 = vmatpush2.bf16.msra.mxu0 0
      %535 = vmatprep.subr.bf16.mxu0 0
      %536 = vmatpush2.bf16.msra.mxu0 0
      %537 = vmatprep.subr.bf16.mxu0 0
      %538 = vmatpush2.bf16.msra.mxu0 0
      %539 = vmatprep.subr.bf16.mxu0 0
      %540 = vmatpush2.bf16.msra.mxu0 0
      %541 = vmatprep.subr.bf16.mxu0 0
      %542 = vmatpush2.bf16.msra.mxu0 0
      %543 = vmatprep.subr.bf16.mxu0 0
      %544 = vmatpush2.bf16.msra.mxu0 0
      %545 = vmatprep.subr.bf16.mxu0 0
      %546 = vmatpush2.bf16.msra.mxu0 0
      %547 = vmatprep.subr.bf16.mxu0 0
      %548 = vmatpush2.bf16.msra.mxu0 0
      %549 = vmatprep.mubr.bf16.mxu0 0
      %550 = vmatmul.mubr.bf16.gmra.mxu0 %v512
      %v551 = vpop.f32.mrf.mxu0
      %v552 = vadd.f32 0.0, %v551
      %v553 = vpop.f32.mrf.mxu0
      %v554 = vpop.f32.mrf.mxu0
      %v555 = vpop.f32.mrf.mxu0
      %556 = vdwg.mxu0
      %v558 = vsel %vm227, %v458, 0
      %v561 = vsel %vm467, %v462, 0
      %563 = vmatprep.subr.bf16.mxu0 0
      %564 = vmatpush1.bf16.msra.mxu0 0
      %565 = vmatprep.subr.bf16.mxu0 0
      %566 = vmatpush1.bf16.msra.mxu0 0
      %567 = vmatprep.subr.bf16.mxu0 0
      %568 = vmatpush1.bf16.msra.mxu0 0
      %569 = vmatprep.subr.bf16.mxu0 0
      %570 = vmatpush1.bf16.msra.mxu0 0
      %571 = vmatprep.subr.bf16.mxu0 0
      %572 = vmatpush1.bf16.msra.mxu0 0
      %573 = vmatprep.subr.bf16.mxu0 0
      %574 = vmatpush1.bf16.msra.mxu0 0
      %575 = vmatprep.subr.bf16.mxu0 0
      %576 = vmatpush1.bf16.msra.mxu0 0
      %577 = vmatprep.subr.bf16.mxu0 0
      %578 = vmatpush1.bf16.msra.mxu0 %v561
      %579 = vmatprep.subr.bf16.mxu0 0
      %580 = vmatpush2.bf16.msra.mxu0 0
      %581 = vmatprep.subr.bf16.mxu0 0
      %582 = vmatpush2.bf16.msra.mxu0 0
      %583 = vmatprep.subr.bf16.mxu0 0
      %584 = vmatpush2.bf16.msra.mxu0 0
      %585 = vmatprep.subr.bf16.mxu0 0
      %586 = vmatpush2.bf16.msra.mxu0 0
      %587 = vmatprep.subr.bf16.mxu0 0
      %588 = vmatpush2.bf16.msra.mxu0 0
      %589 = vmatprep.subr.bf16.mxu0 0
      %590 = vmatpush2.bf16.msra.mxu0 0
      %591 = vmatprep.subr.bf16.mxu0 0
      %592 = vmatpush2.bf16.msra.mxu0 0
      %593 = vmatprep.subr.bf16.mxu0 0
      %594 = vmatpush2.bf16.msra.mxu0 0
      %595 = vmatprep.mubr.bf16.mxu0 0
      %596 = vmatmul.mubr.bf16.gmra.mxu0 %v558
      %v597 = vpop.f32.mrf.mxu0
      %v598 = vadd.f32 0.0, %v597
      %v599 = vpop.f32.mrf.mxu0
      %v600 = vpop.f32.mrf.mxu0
      %v601 = vpop.f32.mrf.mxu0
      %602 = vdwg.mxu0
      %v604 = vsel %vm227, %v459, 0
      %v607 = vsel %vm467, %v463, 0
      %609 = vmatprep.subr.bf16.mxu0 0
      %610 = vmatpush1.bf16.msra.mxu0 0
      %611 = vmatprep.subr.bf16.mxu0 0
      %612 = vmatpush1.bf16.msra.mxu0 0
      %613 = vmatprep.subr.bf16.mxu0 0
      %614 = vmatpush1.bf16.msra.mxu0 0
      %615 = vmatprep.subr.bf16.mxu0 0
      %616 = vmatpush1.bf16.msra.mxu0 0
      %617 = vmatprep.subr.bf16.mxu0 0
      %618 = vmatpush1.bf16.msra.mxu0 0
      %619 = vmatprep.subr.bf16.mxu0 0
      %620 = vmatpush1.bf16.msra.mxu0 0
      %621 = vmatprep.subr.bf16.mxu0 0
      %622 = vmatpush1.bf16.msra.mxu0 0
      %623 = vmatprep.subr.bf16.mxu0 0
      %624 = vmatpush1.bf16.msra.mxu0 %v607
      %625 = vmatprep.subr.bf16.mxu0 0
      %626 = vmatpush2.bf16.msra.mxu0 0
      %627 = vmatprep.subr.bf16.mxu0 0
      %628 = vmatpush2.bf16.msra.mxu0 0
      %629 = vmatprep.subr.bf16.mxu0 0
      %630 = vmatpush2.bf16.msra.mxu0 0
      %631 = vmatprep.subr.bf16.mxu0 0
      %632 = vmatpush2.bf16.msra.mxu0 0
      %633 = vmatprep.subr.bf16.mxu0 0
      %634 = vmatpush2.bf16.msra.mxu0 0
      %635 = vmatprep.subr.bf16.mxu0 0
      %636 = vmatpush2.bf16.msra.mxu0 0
      %637 = vmatprep.subr.bf16.mxu0 0
      %638 = vmatpush2.bf16.msra.mxu0 0
      %639 = vmatprep.subr.bf16.mxu0 0
      %640 = vmatpush2.bf16.msra.mxu0 0
      %641 = vmatprep.mubr.bf16.mxu0 0
      %642 = vmatmul.mubr.bf16.gmra.mxu0 %v604
      %v643 = vpop.f32.mrf.mxu0
      %v644 = vadd.f32 0.0, %v643
      %v645 = vpop.f32.mrf.mxu0
      %v646 = vpop.f32.mrf.mxu0
      %v647 = vpop.f32.mrf.mxu0
      %648 = vdwg.mxu0
      %v649 = vpack.c.bf16 %v506, %v506
      %v650 = vpack.c.bf16 %v552, %v552
      %v651 = vpack.c.bf16 %v598, %v598
      %v652 = vpack.c.bf16 %v644, %v644
      %vm653 = vcmask 60416
      %654 = vst.msk [vmem:[%s216] sm:$0xf] %vm653, %v649
      %655 = vst.msk [vmem:[%s216 + $0x4] sm:$0xf] %vm653, %v650
      %656 = vst.msk [vmem:[%s216 + $0x8] sm:$0xf] %vm653, %v651
      %657 = vst.msk [vmem:[%s216 + $0xc] sm:$0xf] %vm653, %v652
      %s658 = smul.u32 4, %s14
      %p659 = scmp.lt.s32.totalorder %s658, 7
      %s660 = scalar_select %p659, %s658, 7
      %s661 = smul.addr %s660, 4
      %s662 = scalar_lea.vmem %s3, %s661
      // Predicated region
      $region33: #{multi_head_attention.4} parent=31 // pred_check
        %p663 = pneg %p110
      $region34: #{multi_head_attention.4} parent=31 // pred_check_branch
        %665 = sbr.rel (%p663) target = $region36
      $region35: #{multi_head_attention.4} parent=31 // pred_region
        %s666 = smul.u32 4, %s14
      $region36: #{multi_head_attention.4} parent=31 // pred_fallthru
        _
    $region32: #{multi_head_attention.4} parent=5 // pred_fallthru
      _
    %p667 = scmp.le.s32.totalorder 2, %s9
    // Predicated region
    $region37: #{multi_head_attention.4} parent=5 // pred_check
      %p668 = pneg %p667
    $region38: #{multi_head_attention.4} parent=5 // pred_check_branch
      %670 = sbr.rel (%p668) target = $region40
    $region39: #{multi_head_attention.4} parent=5 // pred_region
      %s671 = ssub.s32 %s9, 2
      // Predicated region
      $region41: #{multi_head_attention.4} parent=39 // pred_check
        %p672 = pneg %p116
      $region42: #{multi_head_attention.4} parent=39 // pred_check_branch
        %674 = sbr.rel (%p672) target = $region44
      $region43: #{multi_head_attention.4} parent=39 // pred_region
        %s675 = smul.u32 4, %s15
        %p676 = scmp.lt.s32.totalorder %s675, 7
        %s677 = scalar_select %p676, %s675, 7
        %s678 = smul.addr %s677, 4
        %s679 = scalar_lea.vmem %s3, %s678
      $region44: #{multi_head_attention.4} parent=39 // pred_fallthru
        _
    $region40: #{multi_head_attention.4} parent=5 // pred_fallthru
      _
  $region6: #{multi_head_attention.4} parent=0 // loop_footer
    %s13 = sadd.s32 1, %s9
  $region7: #{multi_head_attention.4} parent=0 // loop_footer_branch
    %8 = sbr.rel target = $region3
  $region8: #{multi_head_attention.4} parent=0 // loop_exit
    _

</llo_original>
